<compile_context>
chip_gen: v7x
topology: tpu7x:2x2x1
jax: 0.10.0
libtpu: 0.0.40
codegen_flags: <defaults>
</compile_context>

<pallas_src>
import functools
import math

import jax
import jax.numpy as jnp
from jax.experimental import pallas as pl
from jax.experimental.pallas import tpu as pltpu


def encoder_layers_kernel(heads,
                          x_ref, bias_ref,
                          wqkv_ref, wfc_ref, bfc_ref,
                          g1_ref, b1_ref,
                          w1_ref, bff1_ref, w2_ref, bff2_ref,
                          g2_ref, b2_ref,
                          out_ref, act_ref):
    layer = pl.program_id(1)
    S, E = act_ref.shape
    D = E // heads

    # Layer 0: seed the VMEM-resident activation from the embedded input.
    @pl.when(layer == 0)
    def _():
        act_ref[...] = x_ref[0]

    x = act_ref[...]            # (S, E) activation, resident across the L axis
    bias = bias_ref[0]          # (S, S) additive mask bias: 0 keep / -1e20 drop

    # ---------------- self-attention ----------------
    # Single lane-dense QKV projection (block-diagonal weights; 1/sqrt(E)
    # already folded into the Q block).
    qkv = jnp.dot(x, wqkv_ref[0], preferred_element_type=jnp.float32)   # (S, 3E)

    ctx_heads = []
    for h in range(heads):
        qh = qkv[:, h * D:(h + 1) * D]                    # (S, D)
        kh = qkv[:, E + h * D:E + (h + 1) * D]            # (S, D)
        vh = qkv[:, 2 * E + h * D:2 * E + (h + 1) * D]    # (S, D)
        # q @ k^T without materializing a transpose.
        energy = jax.lax.dot_general(
            qh, kh, (((1,), (1,)), ((), ())),
            preferred_element_type=jnp.float32) + bias     # (S, S)
        m = jnp.max(energy, axis=-1, keepdims=True)
        p = jnp.exp(energy - m)
        inv = pl.reciprocal(jnp.sum(p, axis=-1, keepdims=True), approx=True)
        att = p * inv
        ctx_heads.append(jnp.dot(att, vh, preferred_element_type=jnp.float32))
    ctx = jnp.concatenate(ctx_heads, axis=-1)              # (S, E) concat over heads

    # fc_out as one (S,E) @ (E,E) matmul.
    fc = jnp.dot(ctx, wfc_ref[0], preferred_element_type=jnp.float32) + bfc_ref[0]

    # residual + LayerNorm 1 (dropout = identity, eval mode)
    h1 = fc + x
    mu = jnp.mean(h1, axis=-1, keepdims=True)
    var = jnp.mean((h1 - mu) ** 2, axis=-1, keepdims=True)
    x1 = (h1 - mu) * jax.lax.rsqrt(var + 1e-5) * g1_ref[0] + b1_ref[0]

    # feed-forward: Linear -> ReLU -> Linear
    hid = jnp.dot(x1, w1_ref[0], preferred_element_type=jnp.float32) + bff1_ref[0]
    hid = jnp.maximum(hid, 0.0)
    ffn = jnp.dot(hid, w2_ref[0], preferred_element_type=jnp.float32) + bff2_ref[0]

    # residual + LayerNorm 2
    h2 = ffn + x1
    mu2 = jnp.mean(h2, axis=-1, keepdims=True)
    var2 = jnp.mean((h2 - mu2) ** 2, axis=-1, keepdims=True)
    y = (h2 - mu2) * jax.lax.rsqrt(var2 + 1e-5) * g2_ref[0] + b2_ref[0]

    act_ref[...] = y

    @pl.when(layer == pl.num_programs(1) - 1)
    def _():
        out_ref[0] = y


def pack_layer_params(params, heads, embed_size):
    """Stack per-layer weights with a leading L axis; build the consolidated
    block-diagonal QKV weight (with 1/sqrt(E) folded into Q)."""
    eye_h = jnp.eye(heads, dtype=jnp.float32)
    inv_sqrt_e = 1.0 / math.sqrt(float(embed_size))

    def qkv_full(p):
        wq = jnp.kron(eye_h, p['wq']) * inv_sqrt_e   # (E, E) block-diagonal
        wk = jnp.kron(eye_h, p['wk'])
        wv = jnp.kron(eye_h, p['wv'])
        return jnp.concatenate([wq, wk, wv], axis=1)  # (E, 3E)

    return dict(
        wqkv=jnp.stack([qkv_full(p) for p in params]),
        wfc=jnp.stack([p['wfc'] for p in params]),
        bfc=jnp.stack([p['bfc'] for p in params]),
        g1=jnp.stack([p['g1'] for p in params]),
        b1=jnp.stack([p['b1'] for p in params]),
        w1=jnp.stack([p['w1'] for p in params]),
        bff1=jnp.stack([p['bff1'] for p in params]),
        w2=jnp.stack([p['w2'] for p in params]),
        bff2=jnp.stack([p['bff2'] for p in params]),
        g2=jnp.stack([p['g2'] for p in params]),
        b2=jnp.stack([p['b2'] for p in params]),
    )


def encoder_forward(tokens, mask3, word_emb, pos_emb, stacked, heads):
    N, S = tokens.shape
    E = word_emb.shape[1]
    L = stacked['wqkv'].shape[0]
    FF = stacked['w1'].shape[-1]

    # Embedding gather + additive mask bias: plain-JAX glue (done once).
    positions = jnp.arange(S)
    x0 = word_emb[tokens] + pos_emb[positions][None, :, :]      # (N, S, E)
    mask_bias = (mask3 - 1.0) * 1e20                            # 0 keep / -1e20 drop

    def lspec(shape):
        nd = len(shape)
        return pl.BlockSpec((1,) + tuple(shape[1:]),
                            lambda n, l, _nd=nd: (l,) + (0,) * (_nd - 1))

    kernel = functools.partial(encoder_layers_kernel, heads)

    return pl.pallas_call(
        kernel,
        out_shape=jax.ShapeDtypeStruct((N, S, E), jnp.float32),
        grid=(N, L),
        in_specs=[
            pl.BlockSpec((1, S, E), lambda n, l: (n, 0, 0)),     # activation (embeddings)
            pl.BlockSpec((1, S, S), lambda n, l: (n, 0, 0)),     # additive mask bias
            lspec((L, E, 3 * E)),                                # wqkv
            lspec((L, E, E)),                                    # wfc
            lspec((L, 1, E)),                                    # bfc
            lspec((L, 1, E)), lspec((L, 1, E)),                  # g1, b1
            lspec((L, E, FF)), lspec((L, 1, FF)),                # w1, bff1
            lspec((L, FF, E)), lspec((L, 1, E)),                 # w2, bff2
            lspec((L, 1, E)), lspec((L, 1, E)),                  # g2, b2
        ],
        out_specs=pl.BlockSpec((1, S, E), lambda n, l: (n, 0, 0)),
        scratch_shapes=[pltpu.VMEM((S, E), jnp.float32)],        # resident activation
        compiler_params=pltpu.CompilerParams(
            dimension_semantics=("parallel", "arbitrary")),
    )(x0, mask_bias,
      stacked['wqkv'], stacked['wfc'], stacked['bfc'],
      stacked['g1'], stacked['b1'],
      stacked['w1'], stacked['bff1'], stacked['w2'], stacked['bff2'],
      stacked['g2'], stacked['b2'])


def reference_encoder(tokens, mask3, word_emb, pos_emb, params, heads):
    """Pure-JAX replica of the PyTorch Encoder forward (dropout = identity)."""
    N, S = tokens.shape
    E = word_emb.shape[1]
    D = E // heads
    positions = jnp.arange(S)
    x = word_emb[tokens] + pos_emb[positions][None, :, :]
    for p in params:
        xh = x.reshape(N, S, heads, D)
        q = xh @ p['wq']
        k = xh @ p['wk']
        v = xh @ p['wv']
        energy = jnp.einsum('nqhd,nkhd->nhqk', q, k)
        energy = jnp.where(mask3[:, None, :, :] == 0.0, -1e20, energy)
        att = jax.nn.softmax(energy / jnp.sqrt(jnp.float32(E)), axis=3)
        ctx = jnp.einsum('nhqk,nkhd->nqhd', att, v).reshape(N, S, E)
        fc = ctx @ p['wfc'] + p['bfc'][0]
        h = fc + x
        mu = jnp.mean(h, axis=-1, keepdims=True)
        var = jnp.mean((h - mu) ** 2, axis=-1, keepdims=True)
        x1 = (h - mu) * jax.lax.rsqrt(var + 1e-5) * p['g1'][0] + p['b1'][0]
        hid = jnp.maximum(x1 @ p['w1'] + p['bff1'][0], 0.0)
        ffn = hid @ p['w2'] + p['bff2'][0]
        h2 = ffn + x1
        mu2 = jnp.mean(h2, axis=-1, keepdims=True)
        var2 = jnp.mean((h2 - mu2) ** 2, axis=-1, keepdims=True)
        x = (h2 - mu2) * jax.lax.rsqrt(var2 + 1e-5) * p['g2'][0] + p['b2'][0]
    return x


if __name__ == "__main__":
    N, S, E, H, FWD, L = 2, 8, 32, 4, 4, 2
    VOCAB, MAXLEN = 50, 16
    D = E // H
    FF = FWD * E

    key = jax.random.PRNGKey(0)
    keys = jax.random.split(key, 4 + L)

    word_emb = jax.random.normal(keys[0], (VOCAB, E), jnp.float32) * 0.5
    pos_emb = jax.random.normal(keys[1], (MAXLEN, E), jnp.float32) * 0.5

    tokens = jax.random.randint(keys[2], (N, S), 1, VOCAB)
    tokens = tokens.at[1, 6:].set(0)                       # padding in batch 1
    key_mask = (tokens != 0).astype(jnp.float32)           # (N, S)
    mask3 = jnp.broadcast_to(key_mask[:, None, :], (N, S, S)).astype(jnp.float32)

    params = []
    for layer in range(L):
        ks = jax.random.split(keys[4 + layer], 12)
        params.append(dict(
            wq=jax.random.normal(ks[0], (D, D), jnp.float32) * 0.2,
            wk=jax.random.normal(ks[1], (D, D), jnp.float32) * 0.2,
            wv=jax.random.normal(ks[2], (D, D), jnp.float32) * 0.2,
            wfc=jax.random.normal(ks[3], (E, E), jnp.float32) * 0.1,
            bfc=0.05 * jax.random.normal(ks[4], (1, E), jnp.float32),
            g1=1.0 + 0.1 * jax.random.normal(ks[5], (1, E), jnp.float32),
            b1=0.05 * jax.random.normal(ks[6], (1, E), jnp.float32),
            w1=jax.random.normal(ks[7], (E, FF), jnp.float32) * 0.1,
            bff1=0.05 * jax.random.normal(ks[8], (1, FF), jnp.float32),
            w2=jax.random.normal(ks[9], (FF, E), jnp.float32) * 0.1,
            bff2=0.05 * jax.random.normal(ks[10], (1, E), jnp.float32),
            g2=1.0 + 0.1 * jax.random.normal(ks[11], (1, E), jnp.float32),
            b2=jnp.zeros((1, E), jnp.float32),
        ))

    stacked = pack_layer_params(params, H, E)

    out = encoder_forward(tokens, mask3, word_emb, pos_emb, stacked, H)
    out = jax.block_until_ready(out)

    ref = reference_encoder(tokens, mask3, word_emb, pos_emb, params, H)
    assert out.shape == (N, S, E)
    # Tolerance loosened slightly vs. a pure-f32 reference: approx EUP reciprocal in
    # the softmax + reordered/consolidated matmuls introduce ~1e-4-level differences.
    assert jnp.allclose(out, ref, atol=5e-3, rtol=5e-3), "Pallas output mismatch vs JAX reference"

    print("KERNEL_OK")
</pallas_src>

<mosaic_0001>
module attributes {stable_mosaic.version = 11 : i64} {
  func.func @encoder_layers_kernel(%arg0: i32, %arg1: i32, %arg2: memref<1x8x32xf32, #tpu.memory_space<vmem>>, %arg3: memref<1x8x8xf32, #tpu.memory_space<vmem>>, %arg4: memref<1x32x96xf32, #tpu.memory_space<vmem>>, %arg5: memref<1x32x32xf32, #tpu.memory_space<vmem>>, %arg6: memref<1x1x32xf32, #tpu.memory_space<vmem>>, %arg7: memref<1x1x32xf32, #tpu.memory_space<vmem>>, %arg8: memref<1x1x32xf32, #tpu.memory_space<vmem>>, %arg9: memref<1x32x128xf32, #tpu.memory_space<vmem>>, %arg10: memref<1x1x128xf32, #tpu.memory_space<vmem>>, %arg11: memref<1x128x32xf32, #tpu.memory_space<vmem>>, %arg12: memref<1x1x32xf32, #tpu.memory_space<vmem>>, %arg13: memref<1x1x32xf32, #tpu.memory_space<vmem>>, %arg14: memref<1x1x32xf32, #tpu.memory_space<vmem>>, %arg15: memref<1x8x32xf32, #tpu.memory_space<vmem>>, %arg16: memref<8x32xf32, #tpu.memory_space<vmem>>) attributes {dimension_semantics = [#tpu.dimension_semantics<parallel>, #tpu.dimension_semantics<arbitrary>], iteration_bounds = array<i64: 2, 2>, scalar_prefetch = 0 : i64, scratch_operands = 1 : i64, tpu.core_type = #tpu.core_type<tc>, window_params = [{transform_indices = @transform_0, window_bounds = array<i64: 1, 8, 32>}, {transform_indices = @transform_1, window_bounds = array<i64: 1, 8, 8>}, {transform_indices = @transform_2, window_bounds = array<i64: 1, 32, 96>}, {transform_indices = @transform_3, window_bounds = array<i64: 1, 32, 32>}, {transform_indices = @transform_4, window_bounds = array<i64: 1, 1, 32>}, {transform_indices = @transform_5, window_bounds = array<i64: 1, 1, 32>}, {transform_indices = @transform_6, window_bounds = array<i64: 1, 1, 32>}, {transform_indices = @transform_7, window_bounds = array<i64: 1, 32, 128>}, {transform_indices = @transform_8, window_bounds = array<i64: 1, 1, 128>}, {transform_indices = @transform_9, window_bounds = array<i64: 1, 128, 32>}, {transform_indices = @transform_10, window_bounds = array<i64: 1, 1, 32>}, {transform_indices = @transform_11, window_bounds = array<i64: 1, 1, 32>}, {transform_indices = @transform_12, window_bounds = array<i64: 1, 1, 32>}, {transform_indices = @transform_13, window_bounds = array<i64: 1, 8, 32>}]} {
    %c0_i32 = arith.constant 0 : i32
    %0 = arith.cmpi eq, %arg1, %c0_i32 : i32
    %1 = arith.extui %0 : i1 to i32
    %c0_i32_0 = arith.constant 0 : i32
    %2 = arith.cmpi ne, %1, %c0_i32_0 : i32
    scf.if %2 {
      %c0_71 = arith.constant 0 : index
      %c0_72 = arith.constant 0 : index
      %c0_73 = arith.constant 0 : index
      %155 = vector.load %arg2[%c0_71, %c0_72, %c0_73] : memref<1x8x32xf32, #tpu.memory_space<vmem>>, vector<1x8x32xf32>
      %156 = vector.shape_cast %155 : vector<1x8x32xf32> to vector<8x32xf32>
      %c0_74 = arith.constant 0 : index
      %c0_75 = arith.constant 0 : index
      %157 = vector.load %arg16[%c0_74, %c0_75] : memref<8x32xf32, #tpu.memory_space<vmem>>, vector<8x32xf32>
      tpu.vector_store %arg16[%c0_74, %c0_75], %156 {strides = array<i32>} : memref<8x32xf32, #tpu.memory_space<vmem>>, vector<8x32xf32>,
    } else {
    }
    %c0 = arith.constant 0 : index
    %c0_1 = arith.constant 0 : index
    %3 = vector.load %arg16[%c0, %c0_1] : memref<8x32xf32, #tpu.memory_space<vmem>>, vector<8x32xf32>
    %c0_2 = arith.constant 0 : index
    %c0_3 = arith.constant 0 : index
    %c0_4 = arith.constant 0 : index
    %4 = vector.load %arg3[%c0_2, %c0_3, %c0_4] : memref<1x8x8xf32, #tpu.memory_space<vmem>>, vector<1x8x8xf32>
    %5 = vector.shape_cast %4 : vector<1x8x8xf32> to vector<8x8xf32>
    %c0_5 = arith.constant 0 : index
    %c0_6 = arith.constant 0 : index
    %c0_7 = arith.constant 0 : index
    %6 = vector.load %arg4[%c0_5, %c0_6, %c0_7] : memref<1x32x96xf32, #tpu.memory_space<vmem>>, vector<1x32x96xf32>
    %7 = vector.shape_cast %6 : vector<1x32x96xf32> to vector<32x96xf32>
    %cst = arith.constant dense<0.000000e+00> : vector<8x96xf32>
    %8 = tpu.matmul %3, %7, %cst {dimension_numbers = #tpu.dot_dimension_numbers<[1], [0], [0], [1], [0, 0, 1, 1], [], []>} : vector<8x32xf32>, vector<32x96xf32>, vector<8x96xf32> -> vector<8x96xf32>
    %9 = vector.extract_strided_slice %8 {offsets = [0, 0], sizes = [8, 8], strides = [1, 1]} : vector<8x96xf32> to vector<8x8xf32>
    %10 = vector.extract_strided_slice %8 {offsets = [0, 32], sizes = [8, 8], strides = [1, 1]} : vector<8x96xf32> to vector<8x8xf32>
    %11 = vector.extract_strided_slice %8 {offsets = [0, 64], sizes = [8, 8], strides = [1, 1]} : vector<8x96xf32> to vector<8x8xf32>
    %cst_8 = arith.constant dense<0.000000e+00> : vector<8x8xf32>
    %12 = tpu.matmul %9, %10, %cst_8 {dimension_numbers = #tpu.dot_dimension_numbers<[1], [1], [0], [0], [0, 0, 1, 0], [], []>} : vector<8x8xf32>, vector<8x8xf32>, vector<8x8xf32> -> vector<8x8xf32>
    %13 = arith.addf %12, %5 : vector<8x8xf32>
    %cst_9 = arith.constant dense<0xFF800000> : vector<8xf32>
    %14 = vector.multi_reduction <maximumf>, %13, %cst_9 [1] : vector<8x8xf32> to vector<8xf32>
    %15 = vector.shape_cast %14 : vector<8xf32> to vector<8x1xf32>
    %16 = vector.broadcast %15 : vector<8x1xf32> to vector<8x8xf32>
    %17 = arith.subf %13, %16 : vector<8x8xf32>
    %18 = math.exp %17 : vector<8x8xf32>
    %cst_10 = arith.constant dense<0.000000e+00> : vector<8xf32>
    %19 = vector.multi_reduction <add>, %18, %cst_10 [1] : vector<8x8xf32> to vector<8xf32>
    %20 = vector.shape_cast %19 : vector<8xf32> to vector<8x1xf32>
    %21 = tpu.reciprocal %20 {approx = true} : vector<8x1xf32> -> vector<8x1xf32>
    %22 = vector.broadcast %21 : vector<8x1xf32> to vector<8x8xf32>
    %23 = arith.mulf %18, %22 : vector<8x8xf32>
    %cst_11 = arith.constant dense<0.000000e+00> : vector<8x8xf32>
    %24 = tpu.matmul %23, %11, %cst_11 {dimension_numbers = #tpu.dot_dimension_numbers<[1], [0], [0], [1], [0, 0, 1, 1], [], []>} : vector<8x8xf32>, vector<8x8xf32>, vector<8x8xf32> -> vector<8x8xf32>
    %25 = vector.extract_strided_slice %8 {offsets = [0, 8], sizes = [8, 8], strides = [1, 1]} : vector<8x96xf32> to vector<8x8xf32>
    %26 = vector.extract_strided_slice %8 {offsets = [0, 40], sizes = [8, 8], strides = [1, 1]} : vector<8x96xf32> to vector<8x8xf32>
    %27 = vector.extract_strided_slice %8 {offsets = [0, 72], sizes = [8, 8], strides = [1, 1]} : vector<8x96xf32> to vector<8x8xf32>
    %cst_12 = arith.constant dense<0.000000e+00> : vector<8x8xf32>
    %28 = tpu.matmul %25, %26, %cst_12 {dimension_numbers = #tpu.dot_dimension_numbers<[1], [1], [0], [0], [0, 0, 1, 0], [], []>} : vector<8x8xf32>, vector<8x8xf32>, vector<8x8xf32> -> vector<8x8xf32>
    %29 = arith.addf %28, %5 : vector<8x8xf32>
    %cst_13 = arith.constant dense<0xFF800000> : vector<8xf32>
    %30 = vector.multi_reduction <maximumf>, %29, %cst_13 [1] : vector<8x8xf32> to vector<8xf32>
    %31 = vector.shape_cast %30 : vector<8xf32> to vector<8x1xf32>
    %32 = vector.broadcast %31 : vector<8x1xf32> to vector<8x8xf32>
    %33 = arith.subf %29, %32 : vector<8x8xf32>
    %34 = math.exp %33 : vector<8x8xf32>
    %cst_14 = arith.constant dense<0.000000e+00> : vector<8xf32>
    %35 = vector.multi_reduction <add>, %34, %cst_14 [1] : vector<8x8xf32> to vector<8xf32>
    %36 = vector.shape_cast %35 : vector<8xf32> to vector<8x1xf32>
    %37 = tpu.reciprocal %36 {approx = true} : vector<8x1xf32> -> vector<8x1xf32>
    %38 = vector.broadcast %37 : vector<8x1xf32> to vector<8x8xf32>
    %39 = arith.mulf %34, %38 : vector<8x8xf32>
    %cst_15 = arith.constant dense<0.000000e+00> : vector<8x8xf32>
    %40 = tpu.matmul %39, %27, %cst_15 {dimension_numbers = #tpu.dot_dimension_numbers<[1], [0], [0], [1], [0, 0, 1, 1], [], []>} : vector<8x8xf32>, vector<8x8xf32>, vector<8x8xf32> -> vector<8x8xf32>
    %41 = vector.extract_strided_slice %8 {offsets = [0, 16], sizes = [8, 8], strides = [1, 1]} : vector<8x96xf32> to vector<8x8xf32>
    %42 = vector.extract_strided_slice %8 {offsets = [0, 48], sizes = [8, 8], strides = [1, 1]} : vector<8x96xf32> to vector<8x8xf32>
    %43 = vector.extract_strided_slice %8 {offsets = [0, 80], sizes = [8, 8], strides = [1, 1]} : vector<8x96xf32> to vector<8x8xf32>
    %cst_16 = arith.constant dense<0.000000e+00> : vector<8x8xf32>
    %44 = tpu.matmul %41, %42, %cst_16 {dimension_numbers = #tpu.dot_dimension_numbers<[1], [1], [0], [0], [0, 0, 1, 0], [], []>} : vector<8x8xf32>, vector<8x8xf32>, vector<8x8xf32> -> vector<8x8xf32>
    %45 = arith.addf %44, %5 : vector<8x8xf32>
    %cst_17 = arith.constant dense<0xFF800000> : vector<8xf32>
    %46 = vector.multi_reduction <maximumf>, %45, %cst_17 [1] : vector<8x8xf32> to vector<8xf32>
    %47 = vector.shape_cast %46 : vector<8xf32> to vector<8x1xf32>
    %48 = vector.broadcast %47 : vector<8x1xf32> to vector<8x8xf32>
    %49 = arith.subf %45, %48 : vector<8x8xf32>
    %50 = math.exp %49 : vector<8x8xf32>
    %cst_18 = arith.constant dense<0.000000e+00> : vector<8xf32>
    %51 = vector.multi_reduction <add>, %50, %cst_18 [1] : vector<8x8xf32> to vector<8xf32>
    %52 = vector.shape_cast %51 : vector<8xf32> to vector<8x1xf32>
    %53 = tpu.reciprocal %52 {approx = true} : vector<8x1xf32> -> vector<8x1xf32>
    %54 = vector.broadcast %53 : vector<8x1xf32> to vector<8x8xf32>
    %55 = arith.mulf %50, %54 : vector<8x8xf32>
    %cst_19 = arith.constant dense<0.000000e+00> : vector<8x8xf32>
    %56 = tpu.matmul %55, %43, %cst_19 {dimension_numbers = #tpu.dot_dimension_numbers<[1], [0], [0], [1], [0, 0, 1, 1], [], []>} : vector<8x8xf32>, vector<8x8xf32>, vector<8x8xf32> -> vector<8x8xf32>
    %57 = vector.extract_strided_slice %8 {offsets = [0, 24], sizes = [8, 8], strides = [1, 1]} : vector<8x96xf32> to vector<8x8xf32>
    %58 = vector.extract_strided_slice %8 {offsets = [0, 56], sizes = [8, 8], strides = [1, 1]} : vector<8x96xf32> to vector<8x8xf32>
    %59 = vector.extract_strided_slice %8 {offsets = [0, 88], sizes = [8, 8], strides = [1, 1]} : vector<8x96xf32> to vector<8x8xf32>
    %cst_20 = arith.constant dense<0.000000e+00> : vector<8x8xf32>
    %60 = tpu.matmul %57, %58, %cst_20 {dimension_numbers = #tpu.dot_dimension_numbers<[1], [1], [0], [0], [0, 0, 1, 0], [], []>} : vector<8x8xf32>, vector<8x8xf32>, vector<8x8xf32> -> vector<8x8xf32>
    %61 = arith.addf %60, %5 : vector<8x8xf32>
    %cst_21 = arith.constant dense<0xFF800000> : vector<8xf32>
    %62 = vector.multi_reduction <maximumf>, %61, %cst_21 [1] : vector<8x8xf32> to vector<8xf32>
    %63 = vector.shape_cast %62 : vector<8xf32> to vector<8x1xf32>
    %64 = vector.broadcast %63 : vector<8x1xf32> to vector<8x8xf32>
    %65 = arith.subf %61, %64 : vector<8x8xf32>
    %66 = math.exp %65 : vector<8x8xf32>
    %cst_22 = arith.constant dense<0.000000e+00> : vector<8xf32>
    %67 = vector.multi_reduction <add>, %66, %cst_22 [1] : vector<8x8xf32> to vector<8xf32>
    %68 = vector.shape_cast %67 : vector<8xf32> to vector<8x1xf32>
    %69 = tpu.reciprocal %68 {approx = true} : vector<8x1xf32> -> vector<8x1xf32>
    %70 = vector.broadcast %69 : vector<8x1xf32> to vector<8x8xf32>
    %71 = arith.mulf %66, %70 : vector<8x8xf32>
    %cst_23 = arith.constant dense<0.000000e+00> : vector<8x8xf32>
    %72 = tpu.matmul %71, %59, %cst_23 {dimension_numbers = #tpu.dot_dimension_numbers<[1], [0], [0], [1], [0, 0, 1, 1], [], []>} : vector<8x8xf32>, vector<8x8xf32>, vector<8x8xf32> -> vector<8x8xf32>
    %73 = tpu.concatenate %24, %40, %56, %72 in 1 : vector<8x8xf32>, vector<8x8xf32>, vector<8x8xf32>, vector<8x8xf32> -> vector<8x32xf32>
    %c0_24 = arith.constant 0 : index
    %c0_25 = arith.constant 0 : index
    %c0_26 = arith.constant 0 : index
    %74 = vector.load %arg5[%c0_24, %c0_25, %c0_26] : memref<1x32x32xf32, #tpu.memory_space<vmem>>, vector<1x32x32xf32>
    %75 = vector.shape_cast %74 : vector<1x32x32xf32> to vector<32x32xf32>
    %cst_27 = arith.constant dense<0.000000e+00> : vector<8x32xf32>
    %76 = tpu.matmul %73, %75, %cst_27 {dimension_numbers = #tpu.dot_dimension_numbers<[1], [0], [0], [1], [0, 0, 1, 1], [], []>} : vector<8x32xf32>, vector<32x32xf32>, vector<8x32xf32> -> vector<8x32xf32>
    %c0_28 = arith.constant 0 : index
    %c0_29 = arith.constant 0 : index
    %c0_30 = arith.constant 0 : index
    %77 = vector.load %arg6[%c0_28, %c0_29, %c0_30] : memref<1x1x32xf32, #tpu.memory_space<vmem>>, vector<1x1x32xf32>
    %78 = vector.shape_cast %77 : vector<1x1x32xf32> to vector<1x32xf32>
    %79 = vector.broadcast %78 : vector<1x32xf32> to vector<8x32xf32>
    %80 = arith.addf %76, %79 : vector<8x32xf32>
    %81 = arith.addf %80, %3 : vector<8x32xf32>
    %cst_31 = arith.constant dense<0.000000e+00> : vector<8xf32>
    %82 = vector.multi_reduction <add>, %81, %cst_31 [1] : vector<8x32xf32> to vector<8xf32>
    %83 = vector.shape_cast %82 : vector<8xf32> to vector<8x1xf32>
    %cst_32 = arith.constant 3.200000e+01 : f32
    %84 = vector.broadcast %cst_32 : f32 to vector<8x1xf32>
    %85 = arith.divf %83, %84 : vector<8x1xf32>
    %86 = vector.broadcast %85 : vector<8x1xf32> to vector<8x32xf32>
    %87 = arith.subf %81, %86 : vector<8x32xf32>
    %88 = arith.mulf %87, %87 : vector<8x32xf32>
    %cst_33 = arith.constant dense<0.000000e+00> : vector<8xf32>
    %89 = vector.multi_reduction <add>, %88, %cst_33 [1] : vector<8x32xf32> to vector<8xf32>
    %90 = vector.shape_cast %89 : vector<8xf32> to vector<8x1xf32>
    %cst_34 = arith.constant 3.200000e+01 : f32
    %91 = vector.broadcast %cst_34 : f32 to vector<8x1xf32>
    %92 = arith.divf %90, %91 : vector<8x1xf32>
    %93 = vector.broadcast %85 : vector<8x1xf32> to vector<8x32xf32>
    %94 = arith.subf %81, %93 : vector<8x32xf32>
    %cst_35 = arith.constant 9.99999974E-6 : f32
    %95 = vector.broadcast %cst_35 : f32 to vector<8x1xf32>
    %96 = arith.addf %92, %95 : vector<8x1xf32>
    %97 = math.rsqrt %96 : vector<8x1xf32>
    %98 = vector.broadcast %97 : vector<8x1xf32> to vector<8x32xf32>
    %99 = arith.mulf %94, %98 : vector<8x32xf32>
    %c0_36 = arith.constant 0 : index
    %c0_37 = arith.constant 0 : index
    %c0_38 = arith.constant 0 : index
    %100 = vector.load %arg7[%c0_36, %c0_37, %c0_38] : memref<1x1x32xf32, #tpu.memory_space<vmem>>, vector<1x1x32xf32>
    %101 = vector.shape_cast %100 : vector<1x1x32xf32> to vector<1x32xf32>
    %102 = vector.broadcast %101 : vector<1x32xf32> to vector<8x32xf32>
    %103 = arith.mulf %99, %102 : vector<8x32xf32>
    %c0_39 = arith.constant 0 : index
    %c0_40 = arith.constant 0 : index
    %c0_41 = arith.constant 0 : index
    %104 = vector.load %arg8[%c0_39, %c0_40, %c0_41] : memref<1x1x32xf32, #tpu.memory_space<vmem>>, vector<1x1x32xf32>
    %105 = vector.shape_cast %104 : vector<1x1x32xf32> to vector<1x32xf32>
    %106 = vector.broadcast %105 : vector<1x32xf32> to vector<8x32xf32>
    %107 = arith.addf %103, %106 : vector<8x32xf32>
    %c0_42 = arith.constant 0 : index
    %c0_43 = arith.constant 0 : index
    %c0_44 = arith.constant 0 : index
    %108 = vector.load %arg9[%c0_42, %c0_43, %c0_44] : memref<1x32x128xf32, #tpu.memory_space<vmem>>, vector<1x32x128xf32>
    %109 = vector.shape_cast %108 : vector<1x32x128xf32> to vector<32x128xf32>
    %cst_45 = arith.constant dense<0.000000e+00> : vector<8x128xf32>
    %110 = tpu.matmul %107, %109, %cst_45 {dimension_numbers = #tpu.dot_dimension_numbers<[1], [0], [0], [1], [0, 0, 1, 1], [], []>} : vector<8x32xf32>, vector<32x128xf32>, vector<8x128xf32> -> vector<8x128xf32>
    %c0_46 = arith.constant 0 : index
    %c0_47 = arith.constant 0 : index
    %c0_48 = arith.constant 0 : index
    %111 = vector.load %arg10[%c0_46, %c0_47, %c0_48] : memref<1x1x128xf32, #tpu.memory_space<vmem>>, vector<1x1x128xf32>
    %112 = vector.shape_cast %111 : vector<1x1x128xf32> to vector<1x128xf32>
    %113 = vector.broadcast %112 : vector<1x128xf32> to vector<8x128xf32>
    %114 = arith.addf %110, %113 : vector<8x128xf32>
    %cst_49 = arith.constant 0.000000e+00 : f32
    %115 = vector.broadcast %cst_49 : f32 to vector<8x128xf32>
    %116 = arith.maximumf %114, %115 : vector<8x128xf32>
    %c0_50 = arith.constant 0 : index
    %c0_51 = arith.constant 0 : index
    %c0_52 = arith.constant 0 : index
    %117 = vector.load %arg11[%c0_50, %c0_51, %c0_52] : memref<1x128x32xf32, #tpu.memory_space<vmem>>, vector<1x128x32xf32>
    %118 = vector.shape_cast %117 : vector<1x128x32xf32> to vector<128x32xf32>
    %cst_53 = arith.constant dense<0.000000e+00> : vector<8x32xf32>
    %119 = tpu.matmul %116, %118, %cst_53 {dimension_numbers = #tpu.dot_dimension_numbers<[1], [0], [0], [1], [0, 0, 1, 1], [], []>} : vector<8x128xf32>, vector<128x32xf32>, vector<8x32xf32> -> vector<8x32xf32>
    %c0_54 = arith.constant 0 : index
    %c0_55 = arith.constant 0 : index
    %c0_56 = arith.constant 0 : index
    %120 = vector.load %arg12[%c0_54, %c0_55, %c0_56] : memref<1x1x32xf32, #tpu.memory_space<vmem>>, vector<1x1x32xf32>
    %121 = vector.shape_cast %120 : vector<1x1x32xf32> to vector<1x32xf32>
    %122 = vector.broadcast %121 : vector<1x32xf32> to vector<8x32xf32>
    %123 = arith.addf %119, %122 : vector<8x32xf32>
    %124 = arith.addf %123, %107 : vector<8x32xf32>
    %cst_57 = arith.constant dense<0.000000e+00> : vector<8xf32>
    %125 = vector.multi_reduction <add>, %124, %cst_57 [1] : vector<8x32xf32> to vector<8xf32>
    %126 = vector.shape_cast %125 : vector<8xf32> to vector<8x1xf32>
    %cst_58 = arith.constant 3.200000e+01 : f32
    %127 = vector.broadcast %cst_58 : f32 to vector<8x1xf32>
    %128 = arith.divf %126, %127 : vector<8x1xf32>
    %129 = vector.broadcast %128 : vector<8x1xf32> to vector<8x32xf32>
    %130 = arith.subf %124, %129 : vector<8x32xf32>
    %131 = arith.mulf %130, %130 : vector<8x32xf32>
    %cst_59 = arith.constant dense<0.000000e+00> : vector<8xf32>
    %132 = vector.multi_reduction <add>, %131, %cst_59 [1] : vector<8x32xf32> to vector<8xf32>
    %133 = vector.shape_cast %132 : vector<8xf32> to vector<8x1xf32>
    %cst_60 = arith.constant 3.200000e+01 : f32
    %134 = vector.broadcast %cst_60 : f32 to vector<8x1xf32>
    %135 = arith.divf %133, %134 : vector<8x1xf32>
    %136 = vector.broadcast %128 : vector<8x1xf32> to vector<8x32xf32>
    %137 = arith.subf %124, %136 : vector<8x32xf32>
    %cst_61 = arith.constant 9.99999974E-6 : f32
    %138 = vector.broadcast %cst_61 : f32 to vector<8x1xf32>
    %139 = arith.addf %135, %138 : vector<8x1xf32>
    %140 = math.rsqrt %139 : vector<8x1xf32>
    %141 = vector.broadcast %140 : vector<8x1xf32> to vector<8x32xf32>
    %142 = arith.mulf %137, %141 : vector<8x32xf32>
    %c0_62 = arith.constant 0 : index
    %c0_63 = arith.constant 0 : index
    %c0_64 = arith.constant 0 : index
    %143 = vector.load %arg13[%c0_62, %c0_63, %c0_64] : memref<1x1x32xf32, #tpu.memory_space<vmem>>, vector<1x1x32xf32>
    %144 = vector.shape_cast %143 : vector<1x1x32xf32> to vector<1x32xf32>
    %145 = vector.broadcast %144 : vector<1x32xf32> to vector<8x32xf32>
    %146 = arith.mulf %142, %145 : vector<8x32xf32>
    %c0_65 = arith.constant 0 : index
    %c0_66 = arith.constant 0 : index
    %c0_67 = arith.constant 0 : index
    %147 = vector.load %arg14[%c0_65, %c0_66, %c0_67] : memref<1x1x32xf32, #tpu.memory_space<vmem>>, vector<1x1x32xf32>
    %148 = vector.shape_cast %147 : vector<1x1x32xf32> to vector<1x32xf32>
    %149 = vector.broadcast %148 : vector<1x32xf32> to vector<8x32xf32>
    %150 = arith.addf %146, %149 : vector<8x32xf32>
    %c0_68 = arith.constant 0 : index
    %c0_69 = arith.constant 0 : index
    %151 = vector.load %arg16[%c0_68, %c0_69] : memref<8x32xf32, #tpu.memory_space<vmem>>, vector<8x32xf32>
    tpu.vector_store %arg16[%c0_68, %c0_69], %150 {strides = array<i32>} : memref<8x32xf32, #tpu.memory_space<vmem>>, vector<8x32xf32>,
    %c1_i32 = arith.constant 1 : i32
    %152 = arith.cmpi eq, %arg1, %c1_i32 : i32
    %153 = arith.extui %152 : i1 to i32
    %c0_i32_70 = arith.constant 0 : i32
    %154 = arith.cmpi ne, %153, %c0_i32_70 : i32
    scf.if %154 {
      %c0_71 = arith.constant 0 : index
      %c0_72 = arith.constant 0 : index
      %c0_73 = arith.constant 0 : index
      %155 = vector.load %arg15[%c0_71, %c0_72, %c0_73] : memref<1x8x32xf32, #tpu.memory_space<vmem>>, vector<1x8x32xf32>
      %156 = vector.shape_cast %155 : vector<1x8x32xf32> to vector<8x32xf32>
      %157 = vector.shape_cast %150 : vector<8x32xf32> to vector<1x8x32xf32>
      tpu.vector_store %arg15[%c0_71, %c0_72, %c0_73], %157 {strides = array<i32>} : memref<1x8x32xf32, #tpu.memory_space<vmem>>, vector<1x8x32xf32>,
    } else {
    }
    return
  }
  func.func @transform_0(%arg0: i32, %arg1: i32) -> (i32, i32, i32) {
    %c0_i32 = arith.constant 0 : i32
    %c0_i32_0 = arith.constant 0 : i32
    %c0_i32_1 = arith.constant 0 : i32
    return %arg0, %c0_i32, %c0_i32_0 : i32, i32, i32
  }
  func.func @transform_1(%arg0: i32, %arg1: i32) -> (i32, i32, i32) {
    %c0_i32 = arith.constant 0 : i32
    %c0_i32_0 = arith.constant 0 : i32
    %c0_i32_1 = arith.constant 0 : i32
    return %arg0, %c0_i32, %c0_i32_0 : i32, i32, i32
  }
  func.func @transform_2(%arg0: i32, %arg1: i32) -> (i32, i32, i32) {
    %c0_i32 = arith.constant 0 : i32
    %c0_i32_0 = arith.constant 0 : i32
    %c0_i32_1 = arith.constant 0 : i32
    return %arg1, %c0_i32, %c0_i32_0 : i32, i32, i32
  }
  func.func @transform_3(%arg0: i32, %arg1: i32) -> (i32, i32, i32) {
    %c0_i32 = arith.constant 0 : i32
    %c0_i32_0 = arith.constant 0 : i32
    %c0_i32_1 = arith.constant 0 : i32
    return %arg1, %c0_i32, %c0_i32_0 : i32, i32, i32
  }
  func.func @transform_4(%arg0: i32, %arg1: i32) -> (i32, i32, i32) {
    %c0_i32 = arith.constant 0 : i32
    %c0_i32_0 = arith.constant 0 : i32
    %c0_i32_1 = arith.constant 0 : i32
    return %arg1, %c0_i32, %c0_i32_0 : i32, i32, i32
  }
  func.func @transform_5(%arg0: i32, %arg1: i32) -> (i32, i32, i32) {
    %c0_i32 = arith.constant 0 : i32
    %c0_i32_0 = arith.constant 0 : i32
    %c0_i32_1 = arith.constant 0 : i32
    return %arg1, %c0_i32, %c0_i32_0 : i32, i32, i32
  }
  func.func @transform_6(%arg0: i32, %arg1: i32) -> (i32, i32, i32) {
    %c0_i32 = arith.constant 0 : i32
    %c0_i32_0 = arith.constant 0 : i32
    %c0_i32_1 = arith.constant 0 : i32
    return %arg1, %c0_i32, %c0_i32_0 : i32, i32, i32
  }
  func.func @transform_7(%arg0: i32, %arg1: i32) -> (i32, i32, i32) {
    %c0_i32 = arith.constant 0 : i32
    %c0_i32_0 = arith.constant 0 : i32
    %c0_i32_1 = arith.constant 0 : i32
    return %arg1, %c0_i32, %c0_i32_0 : i32, i32, i32
  }
  func.func @transform_8(%arg0: i32, %arg1: i32) -> (i32, i32, i32) {
    %c0_i32 = arith.constant 0 : i32
    %c0_i32_0 = arith.constant 0 : i32
    %c0_i32_1 = arith.constant 0 : i32
    return %arg1, %c0_i32, %c0_i32_0 : i32, i32, i32
  }
  func.func @transform_9(%arg0: i32, %arg1: i32) -> (i32, i32, i32) {
    %c0_i32 = arith.constant 0 : i32
    %c0_i32_0 = arith.constant 0 : i32
    %c0_i32_1 = arith.constant 0 : i32
    return %arg1, %c0_i32, %c0_i32_0 : i32, i32, i32
  }
  func.func @transform_10(%arg0: i32, %arg1: i32) -> (i32, i32, i32) {
    %c0_i32 = arith.constant 0 : i32
    %c0_i32_0 = arith.constant 0 : i32
    %c0_i32_1 = arith.constant 0 : i32
    return %arg1, %c0_i32, %c0_i32_0 : i32, i32, i32
  }
  func.func @transform_11(%arg0: i32, %arg1: i32) -> (i32, i32, i32) {
    %c0_i32 = arith.constant 0 : i32
    %c0_i32_0 = arith.constant 0 : i32
    %c0_i32_1 = arith.constant 0 : i32
    return %arg1, %c0_i32, %c0_i32_0 : i32, i32, i32
  }
  func.func @transform_12(%arg0: i32, %arg1: i32) -> (i32, i32, i32) {
    %c0_i32 = arith.constant 0 : i32
    %c0_i32_0 = arith.constant 0 : i32
    %c0_i32_1 = arith.constant 0 : i32
    return %arg1, %c0_i32, %c0_i32_0 : i32, i32, i32
  }
  func.func @transform_13(%arg0: i32, %arg1: i32) -> (i32, i32, i32) {
    %c0_i32 = arith.constant 0 : i32
    %c0_i32_0 = arith.constant 0 : i32
    %c0_i32_1 = arith.constant 0 : i32
    return %arg0, %c0_i32, %c0_i32_0 : i32, i32, i32
  }
}

</mosaic_0001>

<llo_original>
// kernel: tpu_custom_call.1
$region0: #{tpu_custom_call.1}
  #allocation0 [shape = 'u32[]', space=smem, size = 0x4, offset = 0x4, fixed_abs, tag = 'smem constant byte address 0x4 - core index']
  #allocation1 [shape = 'u32[144,128]{1,0:T(1,128)}', space=vmem, size = 0x12000, scoped, tag = 'internal scratch']
  #allocation2 [shape = 'f32[8,32]{1,0:T(8,128)}', space=vmem, size = 0x1000, scoped, tag = 'scratch operand']
  %s0 = inlined_call_operand.vmem [shape: f32[2,8,32], index: 0, kind: input, shape index: {}]
  %s1 = inlined_call_operand.vmem [shape: f32[2,8,8], index: 1, kind: input, shape index: {}]
  %s2 = inlined_call_operand.vmem [shape: f32[2,32,96], index: 2, kind: input, shape index: {}]
  %s3 = inlined_call_operand.vmem [shape: f32[2,32,32], index: 3, kind: input, shape index: {}]
  %s4 = inlined_call_operand.vmem [shape: f32[2,1,32], index: 4, kind: input, shape index: {}]
  %s5 = inlined_call_operand.vmem [shape: f32[2,1,32], index: 5, kind: input, shape index: {}]
  %s6 = inlined_call_operand.vmem [shape: f32[2,1,32], index: 6, kind: input, shape index: {}]
  %s7 = inlined_call_operand.vmem [shape: f32[2,32,128], index: 7, kind: input, shape index: {}]
  %s8 = inlined_call_operand.vmem [shape: f32[2,1,128], index: 8, kind: input, shape index: {}]
  %s9 = inlined_call_operand.vmem [shape: f32[2,128,32], index: 9, kind: input, shape index: {}]
  %s10 = inlined_call_operand.vmem [shape: f32[2,1,32], index: 10, kind: input, shape index: {}]
  %s11 = inlined_call_operand.vmem [shape: f32[2,1,32], index: 11, kind: input, shape index: {}]
  %s12 = inlined_call_operand.vmem [shape: f32[2,1,32], index: 12, kind: input, shape index: {}]
  %s13 = inlined_call_operand.hbm [shape: f32[2,8,32], index: 13, kind: output, shape index: {}]
  %s14 = sld [smem:[#allocation0]]
  $region93: #{tpu_custom_call.1} parent=0
    _
  %s16 = ssub.s32 1, %s14
  %s17 = scalar_select 0, %s16, %s14
  $region1: #{tpu_custom_call.1} parent=0
    #allocation3 [shape = 'u8[8192]{0}', space=vmem, size = 0x2000, scoped, tag = 'output window, operand 0']
    #allocation4 [shape = 's32[2]{0}', space=sflag, size = 0x8, scoped, tag = 'scoped memory for tpu_custom_call.1']
    %18 = vsyncpa [#allocation4], 0
    %s19 = scalar_lea.sflag [#allocation4], 1
    %20 = vsyncpa %s19, 0
    loop: start=0, step=1, limit=6
    $region2: #{tpu_custom_call.1} parent=1 // loop_pre_header
      _
    $region3: #{tpu_custom_call.1} parent=1 // loop_header
      %s22 = sphi 0, %s26
      %p23 = scmp.ge.s32.totalorder %s22, 6
      %s29 = sphi 0, %s41
      %s30 = sphi 0, %s37
      %s31 = sphi 0, %s29
      %s32 = sphi 0, %s30
      %s33 = sphi 0, %s31
      %s34 = sphi 0, %s32
      %s44 = sphi 0, %s46
      %s47 = sphi 0, %s44
      %s48 = sphi 0, %s47
      %s64 = sphi 0, %s48
      %s70 = sphi 0, %s72
      %s73 = sphi 0, %s70
      %s74 = sphi 0, %s73
      %s90 = sphi 0, %s74
      %s96 = sphi 0, %s98
      %s99 = sphi 0, %s96
      %s100 = sphi 0, %s99
      %s116 = sphi 0, %s100
      %s122 = sphi 0, %s124
      %s125 = sphi 0, %s122
      %s126 = sphi 0, %s125
      %s142 = sphi 0, %s126
      %s148 = sphi 0, %s150
      %s151 = sphi 0, %s148
      %s152 = sphi 0, %s151
      %s168 = sphi 0, %s152
      %s174 = sphi 0, %s176
      %s177 = sphi 0, %s174
      %s178 = sphi 0, %s177
      %s194 = sphi 0, %s178
      %s200 = sphi 0, %s202
      %s203 = sphi 0, %s200
      %s204 = sphi 0, %s203
      %s220 = sphi 0, %s204
      %s226 = sphi 0, %s228
      %s229 = sphi 0, %s226
      %s230 = sphi 0, %s229
      %s246 = sphi 0, %s230
      %s252 = sphi 0, %s254
      %s255 = sphi 0, %s252
      %s256 = sphi 0, %s255
      %s272 = sphi 0, %s256
      %s278 = sphi 0, %s280
      %s281 = sphi 0, %s278
      %s282 = sphi 0, %s281
      %s298 = sphi 0, %s282
      %s304 = sphi 0, %s306
      %s307 = sphi 0, %s304
      %s308 = sphi 0, %s307
      %s324 = sphi 0, %s308
      %s330 = sphi 0, %s332
      %s333 = sphi 0, %s330
      %s334 = sphi 0, %s333
      %s350 = sphi 0, %s334
      %s356 = sphi 0, %s358
      %s359 = sphi 0, %s356
      %s360 = sphi 0, %s359
      %s376 = sphi 0, %s360
      %s382 = sphi 0, %s384
      %s385 = sphi 0, %s382
      %s386 = sphi 0, %s385
      %s402 = sphi 0, %s386
    $region4: #{tpu_custom_call.1} parent=1 // loop_header_branch
      %25 = sbr.rel (%p23) target = $region8
    $region5: #{tpu_custom_call.1} parent=1 // loop_body
      %s27 = ssub.s32 %s22, 1
      %s28 = ssub.s32 %s22, 2
      %s35 = sadd.s32 1, %s30
      %p36 = scmp.ge.s32.totalorder %s35, 2
      %s37 = scalar_select %p36, 0, %s35
      %s38 = sadd.s32 1, %s29
      %s39 = scalar_select %p36, %s38, %s29
      %p40 = scmp.ge.s32.totalorder %s39, 2
      %s41 = scalar_select %p40, 0, %s39
      %s42 = ssub.s32 %s29, %s41
      %p43 = scmp.eq.s32.totalorder %s42, 0
      %s45 = sadd.s32 %s44, 1
      %s46 = scalar_select %p43, %s44, %s45
      %p49 = pneg %p43
      %p50 = scmp.eq.s32.totalorder %s22, 3
      %p51 = por %p49, %p50
      %p52 = scmp.ne.s32.totalorder %s44, %s47
      %p53 = scmp.eq.s32.totalorder %s22, 0
      %p54 = por %p52, %p53
      %p55 = scmp.ne.s32.totalorder %s44, %s47
      %p56 = scmp.eq.s32.totalorder %s27, 3
      %p57 = por %p55, %p56
      %p58 = scmp.ne.s32.totalorder %s47, %s48
      %p59 = scmp.eq.s32.totalorder %s27, 0
      %p60 = por %p58, %p59
      %p61 = scmp.ne.s32.totalorder %s47, %s48
      %p62 = scmp.eq.s32.totalorder %s28, 3
      %p63 = por %p61, %p62
      %p65 = scmp.ne.s32.totalorder %s48, %s64
      %p66 = scmp.eq.s32.totalorder %s28, 0
      %p67 = por %p65, %p66
      %s68 = ssub.s32 %s29, %s41
      %p69 = scmp.eq.s32.totalorder %s68, 0
      %s71 = sadd.s32 %s70, 1
      %s72 = scalar_select %p69, %s70, %s71
      %p75 = pneg %p69
      %p76 = scmp.eq.s32.totalorder %s22, 3
      %p77 = por %p75, %p76
      %p78 = scmp.ne.s32.totalorder %s70, %s73
      %p79 = scmp.eq.s32.totalorder %s22, 0
      %p80 = por %p78, %p79
      %p81 = scmp.ne.s32.totalorder %s70, %s73
      %p82 = scmp.eq.s32.totalorder %s27, 3
      %p83 = por %p81, %p82
      %p84 = scmp.ne.s32.totalorder %s73, %s74
      %p85 = scmp.eq.s32.totalorder %s27, 0
      %p86 = por %p84, %p85
      %p87 = scmp.ne.s32.totalorder %s73, %s74
      %p88 = scmp.eq.s32.totalorder %s28, 3
      %p89 = por %p87, %p88
      %p91 = scmp.ne.s32.totalorder %s74, %s90
      %p92 = scmp.eq.s32.totalorder %s28, 0
      %p93 = por %p91, %p92
      %s94 = ssub.s32 %s30, %s37
      %p95 = scmp.eq.s32.totalorder %s94, 0
      %s97 = sadd.s32 %s96, 1
      %s98 = scalar_select %p95, %s96, %s97
      %p101 = pneg %p95
      %p102 = scmp.eq.s32.totalorder %s22, 3
      %p103 = por %p101, %p102
      %p104 = scmp.ne.s32.totalorder %s96, %s99
      %p105 = scmp.eq.s32.totalorder %s22, 0
      %p106 = por %p104, %p105
      %p107 = scmp.ne.s32.totalorder %s96, %s99
      %p108 = scmp.eq.s32.totalorder %s27, 3
      %p109 = por %p107, %p108
      %p110 = scmp.ne.s32.totalorder %s99, %s100
      %p111 = scmp.eq.s32.totalorder %s27, 0
      %p112 = por %p110, %p111
      %p113 = scmp.ne.s32.totalorder %s99, %s100
      %p114 = scmp.eq.s32.totalorder %s28, 3
      %p115 = por %p113, %p114
      %p117 = scmp.ne.s32.totalorder %s100, %s116
      %p118 = scmp.eq.s32.totalorder %s28, 0
      %p119 = por %p117, %p118
      %s120 = ssub.s32 %s30, %s37
      %p121 = scmp.eq.s32.totalorder %s120, 0
      %s123 = sadd.s32 %s122, 1
      %s124 = scalar_select %p121, %s122, %s123
      %p127 = pneg %p121
      %p128 = scmp.eq.s32.totalorder %s22, 3
      %p129 = por %p127, %p128
      %p130 = scmp.ne.s32.totalorder %s122, %s125
      %p131 = scmp.eq.s32.totalorder %s22, 0
      %p132 = por %p130, %p131
      %p133 = scmp.ne.s32.totalorder %s122, %s125
      %p134 = scmp.eq.s32.totalorder %s27, 3
      %p135 = por %p133, %p134
      %p136 = scmp.ne.s32.totalorder %s125, %s126
      %p137 = scmp.eq.s32.totalorder %s27, 0
      %p138 = por %p136, %p137
      %p139 = scmp.ne.s32.totalorder %s125, %s126
      %p140 = scmp.eq.s32.totalorder %s28, 3
      %p141 = por %p139, %p140
      %p143 = scmp.ne.s32.totalorder %s126, %s142
      %p144 = scmp.eq.s32.totalorder %s28, 0
      %p145 = por %p143, %p144
      %s146 = ssub.s32 %s30, %s37
      %p147 = scmp.eq.s32.totalorder %s146, 0
      %s149 = sadd.s32 %s148, 1
      %s150 = scalar_select %p147, %s148, %s149
      %p153 = pneg %p147
      %p154 = scmp.eq.s32.totalorder %s22, 3
      %p155 = por %p153, %p154
      %p156 = scmp.ne.s32.totalorder %s148, %s151
      %p157 = scmp.eq.s32.totalorder %s22, 0
      %p158 = por %p156, %p157
      %p159 = scmp.ne.s32.totalorder %s148, %s151
      %p160 = scmp.eq.s32.totalorder %s27, 3
      %p161 = por %p159, %p160
      %p162 = scmp.ne.s32.totalorder %s151, %s152
      %p163 = scmp.eq.s32.totalorder %s27, 0
      %p164 = por %p162, %p163
      %p165 = scmp.ne.s32.totalorder %s151, %s152
      %p166 = scmp.eq.s32.totalorder %s28, 3
      %p167 = por %p165, %p166
      %p169 = scmp.ne.s32.totalorder %s152, %s168
      %p170 = scmp.eq.s32.totalorder %s28, 0
      %p171 = por %p169, %p170
      %s172 = ssub.s32 %s30, %s37
      %p173 = scmp.eq.s32.totalorder %s172, 0
      %s175 = sadd.s32 %s174, 1
      %s176 = scalar_select %p173, %s174, %s175
      %p179 = pneg %p173
      %p180 = scmp.eq.s32.totalorder %s22, 3
      %p181 = por %p179, %p180
      %p182 = scmp.ne.s32.totalorder %s174, %s177
      %p183 = scmp.eq.s32.totalorder %s22, 0
      %p184 = por %p182, %p183
      %p185 = scmp.ne.s32.totalorder %s174, %s177
      %p186 = scmp.eq.s32.totalorder %s27, 3
      %p187 = por %p185, %p186
      %p188 = scmp.ne.s32.totalorder %s177, %s178
      %p189 = scmp.eq.s32.totalorder %s27, 0
      %p190 = por %p188, %p189
      %p191 = scmp.ne.s32.totalorder %s177, %s178
      %p192 = scmp.eq.s32.totalorder %s28, 3
      %p193 = por %p191, %p192
      %p195 = scmp.ne.s32.totalorder %s178, %s194
      %p196 = scmp.eq.s32.totalorder %s28, 0
      %p197 = por %p195, %p196
      %s198 = ssub.s32 %s30, %s37
      %p199 = scmp.eq.s32.totalorder %s198, 0
      %s201 = sadd.s32 %s200, 1
      %s202 = scalar_select %p199, %s200, %s201
      %p205 = pneg %p199
      %p206 = scmp.eq.s32.totalorder %s22, 3
      %p207 = por %p205, %p206
      %p208 = scmp.ne.s32.totalorder %s200, %s203
      %p209 = scmp.eq.s32.totalorder %s22, 0
      %p210 = por %p208, %p209
      %p211 = scmp.ne.s32.totalorder %s200, %s203
      %p212 = scmp.eq.s32.totalorder %s27, 3
      %p213 = por %p211, %p212
      %p214 = scmp.ne.s32.totalorder %s203, %s204
      %p215 = scmp.eq.s32.totalorder %s27, 0
      %p216 = por %p214, %p215
      %p217 = scmp.ne.s32.totalorder %s203, %s204
      %p218 = scmp.eq.s32.totalorder %s28, 3
      %p219 = por %p217, %p218
      %p221 = scmp.ne.s32.totalorder %s204, %s220
      %p222 = scmp.eq.s32.totalorder %s28, 0
      %p223 = por %p221, %p222
      %s224 = ssub.s32 %s30, %s37
      %p225 = scmp.eq.s32.totalorder %s224, 0
      %s227 = sadd.s32 %s226, 1
      %s228 = scalar_select %p225, %s226, %s227
      %p231 = pneg %p225
      %p232 = scmp.eq.s32.totalorder %s22, 3
      %p233 = por %p231, %p232
      %p234 = scmp.ne.s32.totalorder %s226, %s229
      %p235 = scmp.eq.s32.totalorder %s22, 0
      %p236 = por %p234, %p235
      %p237 = scmp.ne.s32.totalorder %s226, %s229
      %p238 = scmp.eq.s32.totalorder %s27, 3
      %p239 = por %p237, %p238
      %p240 = scmp.ne.s32.totalorder %s229, %s230
      %p241 = scmp.eq.s32.totalorder %s27, 0
      %p242 = por %p240, %p241
      %p243 = scmp.ne.s32.totalorder %s229, %s230
      %p244 = scmp.eq.s32.totalorder %s28, 3
      %p245 = por %p243, %p244
      %p247 = scmp.ne.s32.totalorder %s230, %s246
      %p248 = scmp.eq.s32.totalorder %s28, 0
      %p249 = por %p247, %p248
      %s250 = ssub.s32 %s30, %s37
      %p251 = scmp.eq.s32.totalorder %s250, 0
      %s253 = sadd.s32 %s252, 1
      %s254 = scalar_select %p251, %s252, %s253
      %p257 = pneg %p251
      %p258 = scmp.eq.s32.totalorder %s22, 3
      %p259 = por %p257, %p258
      %p260 = scmp.ne.s32.totalorder %s252, %s255
      %p261 = scmp.eq.s32.totalorder %s22, 0
      %p262 = por %p260, %p261
      %p263 = scmp.ne.s32.totalorder %s252, %s255
      %p264 = scmp.eq.s32.totalorder %s27, 3
      %p265 = por %p263, %p264
      %p266 = scmp.ne.s32.totalorder %s255, %s256
      %p267 = scmp.eq.s32.totalorder %s27, 0
      %p268 = por %p266, %p267
      %p269 = scmp.ne.s32.totalorder %s255, %s256
      %p270 = scmp.eq.s32.totalorder %s28, 3
      %p271 = por %p269, %p270
      %p273 = scmp.ne.s32.totalorder %s256, %s272
      %p274 = scmp.eq.s32.totalorder %s28, 0
      %p275 = por %p273, %p274
      %s276 = ssub.s32 %s30, %s37
      %p277 = scmp.eq.s32.totalorder %s276, 0
      %s279 = sadd.s32 %s278, 1
      %s280 = scalar_select %p277, %s278, %s279
      %p283 = pneg %p277
      %p284 = scmp.eq.s32.totalorder %s22, 3
      %p285 = por %p283, %p284
      %p286 = scmp.ne.s32.totalorder %s278, %s281
      %p287 = scmp.eq.s32.totalorder %s22, 0
      %p288 = por %p286, %p287
      %p289 = scmp.ne.s32.totalorder %s278, %s281
      %p290 = scmp.eq.s32.totalorder %s27, 3
      %p291 = por %p289, %p290
      %p292 = scmp.ne.s32.totalorder %s281, %s282
      %p293 = scmp.eq.s32.totalorder %s27, 0
      %p294 = por %p292, %p293
      %p295 = scmp.ne.s32.totalorder %s281, %s282
      %p296 = scmp.eq.s32.totalorder %s28, 3
      %p297 = por %p295, %p296
      %p299 = scmp.ne.s32.totalorder %s282, %s298
      %p300 = scmp.eq.s32.totalorder %s28, 0
      %p301 = por %p299, %p300
      %s302 = ssub.s32 %s30, %s37
      %p303 = scmp.eq.s32.totalorder %s302, 0
      %s305 = sadd.s32 %s304, 1
      %s306 = scalar_select %p303, %s304, %s305
      %p309 = pneg %p303
      %p310 = scmp.eq.s32.totalorder %s22, 3
      %p311 = por %p309, %p310
      %p312 = scmp.ne.s32.totalorder %s304, %s307
      %p313 = scmp.eq.s32.totalorder %s22, 0
      %p314 = por %p312, %p313
      %p315 = scmp.ne.s32.totalorder %s304, %s307
      %p316 = scmp.eq.s32.totalorder %s27, 3
      %p317 = por %p315, %p316
      %p318 = scmp.ne.s32.totalorder %s307, %s308
      %p319 = scmp.eq.s32.totalorder %s27, 0
      %p320 = por %p318, %p319
      %p321 = scmp.ne.s32.totalorder %s307, %s308
      %p322 = scmp.eq.s32.totalorder %s28, 3
      %p323 = por %p321, %p322
      %p325 = scmp.ne.s32.totalorder %s308, %s324
      %p326 = scmp.eq.s32.totalorder %s28, 0
      %p327 = por %p325, %p326
      %s328 = ssub.s32 %s30, %s37
      %p329 = scmp.eq.s32.totalorder %s328, 0
      %s331 = sadd.s32 %s330, 1
      %s332 = scalar_select %p329, %s330, %s331
      %p335 = pneg %p329
      %p336 = scmp.eq.s32.totalorder %s22, 3
      %p337 = por %p335, %p336
      %p338 = scmp.ne.s32.totalorder %s330, %s333
      %p339 = scmp.eq.s32.totalorder %s22, 0
      %p340 = por %p338, %p339
      %p341 = scmp.ne.s32.totalorder %s330, %s333
      %p342 = scmp.eq.s32.totalorder %s27, 3
      %p343 = por %p341, %p342
      %p344 = scmp.ne.s32.totalorder %s333, %s334
      %p345 = scmp.eq.s32.totalorder %s27, 0
      %p346 = por %p344, %p345
      %p347 = scmp.ne.s32.totalorder %s333, %s334
      %p348 = scmp.eq.s32.totalorder %s28, 3
      %p349 = por %p347, %p348
      %p351 = scmp.ne.s32.totalorder %s334, %s350
      %p352 = scmp.eq.s32.totalorder %s28, 0
      %p353 = por %p351, %p352
      %s354 = ssub.s32 %s30, %s37
      %p355 = scmp.eq.s32.totalorder %s354, 0
      %s357 = sadd.s32 %s356, 1
      %s358 = scalar_select %p355, %s356, %s357
      %p361 = pneg %p355
      %p362 = scmp.eq.s32.totalorder %s22, 3
      %p363 = por %p361, %p362
      %p364 = scmp.ne.s32.totalorder %s356, %s359
      %p365 = scmp.eq.s32.totalorder %s22, 0
      %p366 = por %p364, %p365
      %p367 = scmp.ne.s32.totalorder %s356, %s359
      %p368 = scmp.eq.s32.totalorder %s27, 3
      %p369 = por %p367, %p368
      %p370 = scmp.ne.s32.totalorder %s359, %s360
      %p371 = scmp.eq.s32.totalorder %s27, 0
      %p372 = por %p370, %p371
      %p373 = scmp.ne.s32.totalorder %s359, %s360
      %p374 = scmp.eq.s32.totalorder %s28, 3
      %p375 = por %p373, %p374
      %p377 = scmp.ne.s32.totalorder %s360, %s376
      %p378 = scmp.eq.s32.totalorder %s28, 0
      %p379 = por %p377, %p378
      %s380 = ssub.s32 %s29, %s41
      %p381 = scmp.eq.s32.totalorder %s380, 0
      %s383 = sadd.s32 %s382, 1
      %s384 = scalar_select %p381, %s382, %s383
      %p387 = pneg %p381
      %p388 = scmp.eq.s32.totalorder %s22, 3
      %p389 = por %p387, %p388
      %p390 = scmp.ne.s32.totalorder %s382, %s385
      %p391 = scmp.eq.s32.totalorder %s22, 0
      %p392 = por %p390, %p391
      %p393 = scmp.ne.s32.totalorder %s382, %s385
      %p394 = scmp.eq.s32.totalorder %s27, 3
      %p395 = por %p393, %p394
      %p396 = scmp.ne.s32.totalorder %s385, %s386
      %p397 = scmp.eq.s32.totalorder %s27, 0
      %p398 = por %p396, %p397
      %p399 = scmp.ne.s32.totalorder %s385, %s386
      %p400 = scmp.eq.s32.totalorder %s28, 3
      %p401 = por %p399, %p400
      %p403 = scmp.ne.s32.totalorder %s386, %s402
      %p404 = scmp.eq.s32.totalorder %s28, 0
      %p405 = por %p403, %p404
      %p406 = scmp.le.s32.totalorder 1, %s22
      %p407 = scmp.lt.s32.totalorder %s22, 5
      %p408 = pnand %p406, %p407
      %p409 = pneg %p408
      // Predicated region
      $region9: #{tpu_custom_call.1} parent=5 // pred_check
        _
      $region10: #{tpu_custom_call.1} parent=5 // pred_check_branch
        %411 = sbr.rel (%p408) target = $region12
      $region11: #{tpu_custom_call.1} parent=5 // pred_region
        %s412 = ssub.s32 %s22, 1
      $region12: #{tpu_custom_call.1} parent=5 // pred_fallthru
        _
      %p413 = scmp.lt.s32.totalorder %s22, 4
      // Predicated region
      $region13: #{tpu_custom_call.1} parent=5 // pred_check
        %p414 = pneg %p413
      $region14: #{tpu_custom_call.1} parent=5 // pred_check_branch
        %416 = sbr.rel (%p414) target = $region16
      $region15: #{tpu_custom_call.1} parent=5 // pred_region
        // Predicated region
        $region17: #{tpu_custom_call.1} parent=15 // pred_check
          %p417 = pneg %p54
        $region18: #{tpu_custom_call.1} parent=15 // pred_check_branch
          %419 = sbr.rel (%p417) target = $region20
        $region19: #{tpu_custom_call.1} parent=15 // pred_region
          %p420 = scmp.lt.s32.totalorder %s29, 1
          %s421 = scalar_select %p420, %s29, 1
          %s422 = smul.addr %s421, 8
          %s423 = scalar_lea.vmem %s0, %s422
        $region20: #{tpu_custom_call.1} parent=15 // pred_fallthru
          _
        // Predicated region
        $region21: #{tpu_custom_call.1} parent=15 // pred_check
          %p424 = pneg %p80
        $region22: #{tpu_custom_call.1} parent=15 // pred_check_branch
          %426 = sbr.rel (%p424) target = $region24
        $region23: #{tpu_custom_call.1} parent=15 // pred_region
          %p427 = scmp.lt.s32.totalorder %s29, 1
          %s428 = scalar_select %p427, %s29, 1
          %s429 = smul.addr %s428, 8
          %s430 = scalar_lea.vmem %s1, %s429
        $region24: #{tpu_custom_call.1} parent=15 // pred_fallthru
          _
        // Predicated region
        $region25: #{tpu_custom_call.1} parent=15 // pred_check
          %p431 = pneg %p106
        $region26: #{tpu_custom_call.1} parent=15 // pred_check_branch
          %433 = sbr.rel (%p431) target = $region28
        $region27: #{tpu_custom_call.1} parent=15 // pred_region
          %p434 = scmp.lt.s32.totalorder %s30, 1
          %s435 = scalar_select %p434, %s30, 1
          %s436 = smul.addr %s435, 4
          %s437 = smul.addr %s436, 8
          %s438 = scalar_lea.vmem %s2, %s437
        $region28: #{tpu_custom_call.1} parent=15 // pred_fallthru
          _
        // Predicated region
        $region29: #{tpu_custom_call.1} parent=15 // pred_check
          %p439 = pneg %p132
        $region30: #{tpu_custom_call.1} parent=15 // pred_check_branch
          %441 = sbr.rel (%p439) target = $region32
        $region31: #{tpu_custom_call.1} parent=15 // pred_region
          %p442 = scmp.lt.s32.totalorder %s30, 1
          %s443 = scalar_select %p442, %s30, 1
          %s444 = smul.addr %s443, 4
          %s445 = smul.addr %s444, 8
          %s446 = scalar_lea.vmem %s3, %s445
        $region32: #{tpu_custom_call.1} parent=15 // pred_fallthru
          _
        // Predicated region
        $region33: #{tpu_custom_call.1} parent=15 // pred_check
          %p447 = pneg %p158
        $region34: #{tpu_custom_call.1} parent=15 // pred_check_branch
          %449 = sbr.rel (%p447) target = $region36
        $region35: #{tpu_custom_call.1} parent=15 // pred_region
          %p450 = scmp.lt.s32.totalorder %s30, 1
          %s451 = scalar_select %p450, %s30, 1
          %s452 = scalar_lea.vmem %s4, %s451
        $region36: #{tpu_custom_call.1} parent=15 // pred_fallthru
          _
        // Predicated region
        $region37: #{tpu_custom_call.1} parent=15 // pred_check
          %p453 = pneg %p184
        $region38: #{tpu_custom_call.1} parent=15 // pred_check_branch
          %455 = sbr.rel (%p453) target = $region40
        $region39: #{tpu_custom_call.1} parent=15 // pred_region
          %p456 = scmp.lt.s32.totalorder %s30, 1
          %s457 = scalar_select %p456, %s30, 1
          %s458 = scalar_lea.vmem %s5, %s457
        $region40: #{tpu_custom_call.1} parent=15 // pred_fallthru
          _
        // Predicated region
        $region41: #{tpu_custom_call.1} parent=15 // pred_check
          %p459 = pneg %p210
        $region42: #{tpu_custom_call.1} parent=15 // pred_check_branch
          %461 = sbr.rel (%p459) target = $region44
        $region43: #{tpu_custom_call.1} parent=15 // pred_region
          %p462 = scmp.lt.s32.totalorder %s30, 1
          %s463 = scalar_select %p462, %s30, 1
          %s464 = scalar_lea.vmem %s6, %s463
        $region44: #{tpu_custom_call.1} parent=15 // pred_fallthru
          _
        // Predicated region
        $region45: #{tpu_custom_call.1} parent=15 // pred_check
          %p465 = pneg %p236
        $region46: #{tpu_custom_call.1} parent=15 // pred_check_branch
          %467 = sbr.rel (%p465) target = $region48
        $region47: #{tpu_custom_call.1} parent=15 // pred_region
          %p468 = scmp.lt.s32.totalorder %s30, 1
          %s469 = scalar_select %p468, %s30, 1
          %s470 = smul.addr %s469, 4
          %s471 = smul.addr %s470, 8
          %s472 = scalar_lea.vmem %s7, %s471
        $region48: #{tpu_custom_call.1} parent=15 // pred_fallthru
          _
        // Predicated region
        $region49: #{tpu_custom_call.1} parent=15 // pred_check
          %p473 = pneg %p262
        $region50: #{tpu_custom_call.1} parent=15 // pred_check_branch
          %475 = sbr.rel (%p473) target = $region52
        $region51: #{tpu_custom_call.1} parent=15 // pred_region
          %p476 = scmp.lt.s32.totalorder %s30, 1
          %s477 = scalar_select %p476, %s30, 1
          %s478 = scalar_lea.vmem %s8, %s477
        $region52: #{tpu_custom_call.1} parent=15 // pred_fallthru
          _
        // Predicated region
        $region53: #{tpu_custom_call.1} parent=15 // pred_check
          %p479 = pneg %p288
        $region54: #{tpu_custom_call.1} parent=15 // pred_check_branch
          %481 = sbr.rel (%p479) target = $region56
        $region55: #{tpu_custom_call.1} parent=15 // pred_region
          %p482 = scmp.lt.s32.totalorder %s30, 1
          %s483 = scalar_select %p482, %s30, 1
          %s484 = smul.addr %s483, 16
          %s485 = smul.addr %s484, 8
          %s486 = scalar_lea.vmem %s9, %s485
        $region56: #{tpu_custom_call.1} parent=15 // pred_fallthru
          _
        // Predicated region
        $region57: #{tpu_custom_call.1} parent=15 // pred_check
          %p487 = pneg %p314
        $region58: #{tpu_custom_call.1} parent=15 // pred_check_branch
          %489 = sbr.rel (%p487) target = $region60
        $region59: #{tpu_custom_call.1} parent=15 // pred_region
          %p490 = scmp.lt.s32.totalorder %s30, 1
          %s491 = scalar_select %p490, %s30, 1
          %s492 = scalar_lea.vmem %s10, %s491
        $region60: #{tpu_custom_call.1} parent=15 // pred_fallthru
          _
        // Predicated region
        $region61: #{tpu_custom_call.1} parent=15 // pred_check
          %p493 = pneg %p340
        $region62: #{tpu_custom_call.1} parent=15 // pred_check_branch
          %495 = sbr.rel (%p493) target = $region64
        $region63: #{tpu_custom_call.1} parent=15 // pred_region
          %p496 = scmp.lt.s32.totalorder %s30, 1
          %s497 = scalar_select %p496, %s30, 1
          %s498 = scalar_lea.vmem %s11, %s497
        $region64: #{tpu_custom_call.1} parent=15 // pred_fallthru
          _
        // Predicated region
        $region65: #{tpu_custom_call.1} parent=15 // pred_check
          %p499 = pneg %p366
        $region66: #{tpu_custom_call.1} parent=15 // pred_check_branch
          %501 = sbr.rel (%p499) target = $region68
        $region67: #{tpu_custom_call.1} parent=15 // pred_region
          %p502 = scmp.lt.s32.totalorder %s30, 1
          %s503 = scalar_select %p502, %s30, 1
          %s504 = scalar_lea.vmem %s12, %s503
        $region68: #{tpu_custom_call.1} parent=15 // pred_fallthru
          _
      $region16: #{tpu_custom_call.1} parent=5 // pred_fallthru
        _
      %p505 = scmp.le.s32.totalorder 1, %s22
      %p506 = scmp.lt.s32.totalorder %s22, 5
      %p507 = pnand %p505, %p506
      %p508 = pneg %p507
      // Predicated region
      $region69: #{tpu_custom_call.1} parent=5 // pred_check
        _
      $region70: #{tpu_custom_call.1} parent=5 // pred_check_branch
        %510 = sbr.rel (%p507) target = $region72
      $region71: #{tpu_custom_call.1} parent=5 // pred_region
        %s511 = ssub.s32 %s22, 1
        %p512 = scmp.lt.s32.totalorder %s31, 1
        %s513 = scalar_select %p512, %s31, 1
        %s514 = smul.addr %s513, 8
        %s515 = scalar_lea.vmem %s0, %s514
        %p516 = pneg %p60
        %p517 = pneg %p57
        %p518 = scmp.lt.s32.totalorder %s31, 1
        %s519 = scalar_select %p518, %s31, 1
        %s520 = smul.addr %s519, 8
        %s521 = scalar_lea.vmem %s1, %s520
        %p522 = pneg %p86
        %p523 = pneg %p83
        %p524 = scmp.lt.s32.totalorder %s32, 1
        %s525 = scalar_select %p524, %s32, 1
        %s526 = smul.addr %s525, 4
        %s527 = smul.addr %s526, 8
        %s528 = scalar_lea.vmem %s2, %s527
        %p529 = pneg %p112
        %p530 = pneg %p109
        %p531 = scmp.lt.s32.totalorder %s32, 1
        %s532 = scalar_select %p531, %s32, 1
        %s533 = smul.addr %s532, 4
        %s534 = smul.addr %s533, 8
        %s535 = scalar_lea.vmem %s3, %s534
        %p536 = pneg %p138
        %p537 = pneg %p135
        %p538 = scmp.lt.s32.totalorder %s32, 1
        %s539 = scalar_select %p538, %s32, 1
        %s540 = scalar_lea.vmem %s4, %s539
        %p541 = pneg %p164
        %p542 = pneg %p161
        %p543 = scmp.lt.s32.totalorder %s32, 1
        %s544 = scalar_select %p543, %s32, 1
        %s545 = scalar_lea.vmem %s5, %s544
        %p546 = pneg %p190
        %p547 = pneg %p187
        %p548 = scmp.lt.s32.totalorder %s32, 1
        %s549 = scalar_select %p548, %s32, 1
        %s550 = scalar_lea.vmem %s6, %s549
        %p551 = pneg %p216
        %p552 = pneg %p213
        %p553 = scmp.lt.s32.totalorder %s32, 1
        %s554 = scalar_select %p553, %s32, 1
        %s555 = smul.addr %s554, 4
        %s556 = smul.addr %s555, 8
        %s557 = scalar_lea.vmem %s7, %s556
        %p558 = pneg %p242
        %p559 = pneg %p239
        %p560 = scmp.lt.s32.totalorder %s32, 1
        %s561 = scalar_select %p560, %s32, 1
        %s562 = scalar_lea.vmem %s8, %s561
        %p563 = pneg %p268
        %p564 = pneg %p265
        %p565 = scmp.lt.s32.totalorder %s32, 1
        %s566 = scalar_select %p565, %s32, 1
        %s567 = smul.addr %s566, 16
        %s568 = smul.addr %s567, 8
        %s569 = scalar_lea.vmem %s9, %s568
        %p570 = pneg %p294
        %p571 = pneg %p291
        %p572 = scmp.lt.s32.totalorder %s32, 1
        %s573 = scalar_select %p572, %s32, 1
        %s574 = scalar_lea.vmem %s10, %s573
        %p575 = pneg %p320
        %p576 = pneg %p317
        %p577 = scmp.lt.s32.totalorder %s32, 1
        %s578 = scalar_select %p577, %s32, 1
        %s579 = scalar_lea.vmem %s11, %s578
        %p580 = pneg %p346
        %p581 = pneg %p343
        %p582 = scmp.lt.s32.totalorder %s32, 1
        %s583 = scalar_select %p582, %s32, 1
        %s584 = scalar_lea.vmem %s12, %s583
        %p585 = pneg %p372
        %p586 = pneg %p369
        %p587 = pneg %p398
        %p588 = pneg %p395
        %s589 = sand.u32 %s385, 1
        %s590 = scalar_lea.sflag [#allocation4], %s589
        %s591 = sand.u32 %s385, 1
        %s592 = smul.addr %s591, 8
        %s593 = scalar_lea.vmem [#allocation3], %s592
        %p594 = scmp.lt.s32.totalorder %s31, 1
        %s595 = scalar_select %p594, %s31, 1
        %s596 = smul.addr %s595, 8
        %s597 = scalar_lea.vmem %s0, %s596
        %p598 = scmp.lt.s32.totalorder %s31, 1
        %s599 = scalar_select %p598, %s31, 1
        %s600 = smul.addr %s599, 8
        %s601 = scalar_lea.vmem %s1, %s600
        %p602 = scmp.lt.s32.totalorder %s32, 1
        %s603 = scalar_select %p602, %s32, 1
        %s604 = smul.addr %s603, 4
        %s605 = smul.addr %s604, 8
        %s606 = scalar_lea.vmem %s2, %s605
        %p607 = scmp.lt.s32.totalorder %s32, 1
        %s608 = scalar_select %p607, %s32, 1
        %s609 = smul.addr %s608, 4
        %s610 = smul.addr %s609, 8
        %s611 = scalar_lea.vmem %s3, %s610
        %p612 = scmp.lt.s32.totalorder %s32, 1
        %s613 = scalar_select %p612, %s32, 1
        %s614 = scalar_lea.vmem %s4, %s613
        %p615 = scmp.lt.s32.totalorder %s32, 1
        %s616 = scalar_select %p615, %s32, 1
        %s617 = scalar_lea.vmem %s5, %s616
        %p618 = scmp.lt.s32.totalorder %s32, 1
        %s619 = scalar_select %p618, %s32, 1
        %s620 = scalar_lea.vmem %s6, %s619
        %p621 = scmp.lt.s32.totalorder %s32, 1
        %s622 = scalar_select %p621, %s32, 1
        %s623 = smul.addr %s622, 4
        %s624 = smul.addr %s623, 8
        %s625 = scalar_lea.vmem %s7, %s624
        %p626 = scmp.lt.s32.totalorder %s32, 1
        %s627 = scalar_select %p626, %s32, 1
        %s628 = scalar_lea.vmem %s8, %s627
        %p629 = scmp.lt.s32.totalorder %s32, 1
        %s630 = scalar_select %p629, %s32, 1
        %s631 = smul.addr %s630, 16
        %s632 = smul.addr %s631, 8
        %s633 = scalar_lea.vmem %s9, %s632
        %p634 = scmp.lt.s32.totalorder %s32, 1
        %s635 = scalar_select %p634, %s32, 1
        %s636 = scalar_lea.vmem %s10, %s635
        %p637 = scmp.lt.s32.totalorder %s32, 1
        %s638 = scalar_select %p637, %s32, 1
        %s639 = scalar_lea.vmem %s11, %s638
        %p640 = scmp.lt.s32.totalorder %s32, 1
        %s641 = scalar_select %p640, %s32, 1
        %s642 = scalar_lea.vmem %s12, %s641
        %p643 = scmp.eq.s32.totalorder %s32, 0
        // Predicated region
        $region73: #{tpu_custom_call.1} parent=71 // pred_check
          %p644 = pneg %p643
        $region74: #{tpu_custom_call.1} parent=71 // pred_check_branch
          %646 = sbr.rel (%p644) target = $region76
        $region75: #{tpu_custom_call.1} parent=71 // pred_region
          %v647 = vld [vmem:[%s597] sm:$0xff]
          %vm648 = vcmask 261120
          %649 = vst.msk [vmem:[#allocation2] sm:$0xff] %vm648, %v647
        $region76: #{tpu_custom_call.1} parent=71 // pred_fallthru
          _
        %v650 = vld [vmem:[#allocation2] sm:$0xff]
        %v651 = vld [vmem:[%s601] sm:$0xff]
        %v652 = vld [vmem:[%s606] sm:$0xff]
        %v653 = vld [vmem:[%s606 + $0x8] sm:$0xff]
        %v654 = vld [vmem:[%s606 + $0x10] sm:$0xff]
        %v655 = vld [vmem:[%s606 + $0x18] sm:$0xff]
        %vm656 = vcmask 261120
        %v658 = vsel %vm656, %v650, 0
        %660 = vmatprep.subr.mxu0 0.0
        %661 = vmatpush1.msra.mxu0 %v652
        %662 = vmatprep.subr.mxu0 0.0
        %663 = vmatpush1.msra.mxu0 %v653
        %664 = vmatprep.subr.mxu0 0.0
        %665 = vmatpush1.msra.mxu0 %v654
        %666 = vmatprep.subr.mxu0 0.0
        %667 = vmatpush1.msra.mxu0 %v655
        %668 = vmatprep.subr.mxu0 0.0
        %669 = vmatpush1.msra.mxu0 0.0
        %670 = vmatprep.subr.mxu0 0.0
        %671 = vmatpush1.msra.mxu0 0.0
        %672 = vmatprep.subr.mxu0 0.0
        %673 = vmatpush1.msra.mxu0 0.0
        %674 = vmatprep.subr.mxu0 0.0
        %675 = vmatpush1.msra.mxu0 0.0
        %676 = vmatprep.subr.mxu0 0.0
        %677 = vmatpush1.msra.mxu0 0.0
        %678 = vmatprep.subr.mxu0 0.0
        %679 = vmatpush1.msra.mxu0 0.0
        %680 = vmatprep.subr.mxu0 0.0
        %681 = vmatpush1.msra.mxu0 0.0
        %682 = vmatprep.subr.mxu0 0.0
        %683 = vmatpush1.msra.mxu0 0.0
        %684 = vmatprep.subr.mxu0 0.0
        %685 = vmatpush1.msra.mxu0 0.0
        %686 = vmatprep.subr.mxu0 0.0
        %687 = vmatpush1.msra.mxu0 0.0
        %688 = vmatprep.subr.mxu0 0.0
        %689 = vmatpush1.msra.mxu0 0.0
        %690 = vmatprep.subr.mxu0 0.0
        %691 = vmatpush1.msra.mxu0 0.0
        %692 = vmatprep.subr.mxu0 0.0
        %693 = vmatpush1.msra.mxu0 0.0
        %694 = vmatprep.subr.mxu0 0.0
        %695 = vmatpush1.msra.mxu0 0.0
        %696 = vmatprep.subr.mxu0 0.0
        %697 = vmatpush1.msra.mxu0 0.0
        %698 = vmatprep.subr.mxu0 0.0
        %699 = vmatpush1.msra.mxu0 0.0
        %700 = vmatprep.subr.mxu0 0.0
        %701 = vmatpush1.msra.mxu0 0.0
        %702 = vmatprep.subr.mxu0 0.0
        %703 = vmatpush1.msra.mxu0 0.0
        %704 = vmatprep.subr.mxu0 0.0
        %705 = vmatpush1.msra.mxu0 0.0
        %706 = vmatprep.subr.mxu0 0.0
        %707 = vmatpush1.msra.mxu0 0.0
        %708 = vmatprep.subr.mxu0 0.0
        %709 = vmatpush1.msra.mxu0 0.0
        %710 = vmatprep.subr.mxu0 0.0
        %711 = vmatpush1.msra.mxu0 0.0
        %712 = vmatprep.subr.mxu0 0.0
        %713 = vmatpush1.msra.mxu0 0.0
        %714 = vmatprep.subr.mxu0 0.0
        %715 = vmatpush1.msra.mxu0 0.0
        %716 = vmatprep.subr.mxu0 0.0
        %717 = vmatpush1.msra.mxu0 0.0
        %718 = vmatprep.subr.mxu0 0.0
        %719 = vmatpush1.msra.mxu0 0.0
        %720 = vmatprep.subr.mxu0 0.0
        %721 = vmatpush1.msra.mxu0 0.0
        %722 = vmatprep.subr.mxu0 0.0
        %723 = vmatpush1.msra.mxu0 0.0
        %724 = vmatprep.mubr.f32.mxu0 0.0
        %725 = vmatmul.mubr.f32.gmra.mrb[0].mxu0 %v658
        %v726 = vpop.f32.mrb[0].mxu0
        %v727 = vadd.f32 0.0, %v726
        %v728 = vpop.f32.mrb[0].mxu0
        %729 = vdwg.mxu0
        %731 = vrot.lane.b32.xlu0 %v727, 96
        %v732 = vpop.permute.xlu0 %731
        %vm733 = vcmask 64512
        %v734 = vsel %vm733, %v727, 0
        %v736 = vsel %vm733, %v732, 0
        %738 = vmatprep.subr.mxu0 0.0
        %739 = vmatpush1.xpose.msra.mxu0 %v736
        %740 = vmatprep.subr.mxu0 0.0
        %741 = vmatpush1.xpose.msra.mxu0 0.0
        %742 = vmatprep.subr.mxu0 0.0
        %743 = vmatpush1.xpose.msra.mxu0 0.0
        %744 = vmatprep.subr.mxu0 0.0
        %745 = vmatpush1.xpose.msra.mxu0 0.0
        %746 = vmatprep.subr.mxu0 0.0
        %747 = vmatpush1.xpose.msra.mxu0 0.0
        %748 = vmatprep.subr.mxu0 0.0
        %749 = vmatpush1.xpose.msra.mxu0 0.0
        %750 = vmatprep.subr.mxu0 0.0
        %751 = vmatpush1.xpose.msra.mxu0 0.0
        %752 = vmatprep.subr.mxu0 0.0
        %753 = vmatpush1.xpose.msra.mxu0 0.0
        %754 = vmatprep.subr.mxu0 0.0
        %755 = vmatpush1.xpose.msra.mxu0 0.0
        %756 = vmatprep.subr.mxu0 0.0
        %757 = vmatpush1.xpose.msra.mxu0 0.0
        %758 = vmatprep.subr.mxu0 0.0
        %759 = vmatpush1.xpose.msra.mxu0 0.0
        %760 = vmatprep.subr.mxu0 0.0
        %761 = vmatpush1.xpose.msra.mxu0 0.0
        %762 = vmatprep.subr.mxu0 0.0
        %763 = vmatpush1.xpose.msra.mxu0 0.0
        %764 = vmatprep.subr.mxu0 0.0
        %765 = vmatpush1.xpose.msra.mxu0 0.0
        %766 = vmatprep.subr.mxu0 0.0
        %767 = vmatpush1.xpose.msra.mxu0 0.0
        %768 = vmatprep.subr.mxu0 0.0
        %769 = vmatpush1.xpose.msra.mxu0 0.0
        %770 = vmatprep.subr.mxu0 0.0
        %771 = vmatpush1.xpose.msra.mxu0 0.0
        %772 = vmatprep.subr.mxu0 0.0
        %773 = vmatpush1.xpose.msra.mxu0 0.0
        %774 = vmatprep.subr.mxu0 0.0
        %775 = vmatpush1.xpose.msra.mxu0 0.0
        %776 = vmatprep.subr.mxu0 0.0
        %777 = vmatpush1.xpose.msra.mxu0 0.0
        %778 = vmatprep.subr.mxu0 0.0
        %779 = vmatpush1.xpose.msra.mxu0 0.0
        %780 = vmatprep.subr.mxu0 0.0
        %781 = vmatpush1.xpose.msra.mxu0 0.0
        %782 = vmatprep.subr.mxu0 0.0
        %783 = vmatpush1.xpose.msra.mxu0 0.0
        %784 = vmatprep.subr.mxu0 0.0
        %785 = vmatpush1.xpose.msra.mxu0 0.0
        %786 = vmatprep.subr.mxu0 0.0
        %787 = vmatpush1.xpose.msra.mxu0 0.0
        %788 = vmatprep.subr.mxu0 0.0
        %789 = vmatpush1.xpose.msra.mxu0 0.0
        %790 = vmatprep.subr.mxu0 0.0
        %791 = vmatpush1.xpose.msra.mxu0 0.0
        %792 = vmatprep.subr.mxu0 0.0
        %793 = vmatpush1.xpose.msra.mxu0 0.0
        %794 = vmatprep.subr.mxu0 0.0
        %795 = vmatpush1.xpose.msra.mxu0 0.0
        %796 = vmatprep.subr.mxu0 0.0
        %797 = vmatpush1.xpose.msra.mxu0 0.0
        %798 = vmatprep.subr.mxu0 0.0
        %799 = vmatpush1.xpose.msra.mxu0 0.0
        %800 = vmatprep.subr.mxu0 0.0
        %801 = vmatpush1.xpose.msra.mxu0 0.0
        %802 = vmatprep.mubr.f32.mxu0 0.0
        %803 = vmatmul.mubr.f32.gmra.mrb[0].mxu0 %v734
        %v804 = vpop.f32.mrb[0].mxu0
        %v805 = vadd.f32 %v651, %v804
        %v806 = vpop.f32.mrb[0].mxu0
        %807 = vdwg.mxu0
        %v808 = vsel %vm733, %v805, -inf
        %809 = vmax.xlane.f32.xlu0 %v808
        %v810 = vpop.xlane.xlu0 %809
        %v811 = vsub.f32 %v805, %v810
        %v812 = vmul.f32 %v811, 1.442695
        %v813 = vpow.pop %v812
        %v814 = vsel %vm733, %v813, 0.0
        %815 = vadd.xlane.f32.xlu0 %v814
        %v816 = vpop.xlane.xlu0 %815
        %v817 = vrcp.pop %v816
        %v818 = vmul.f32 %v813, %v817
        %819 = vrot.lane.b32.xlu0 %v727, 64
        %v820 = vpop.permute.xlu0 %819
        %v823 = vsel %vm733, %v818, 0
        %825 = vmatprep.subr.mxu0 0.0
        %826 = vmatpush1.msra.mxu0 %v820
        %827 = vmatprep.subr.mxu0 0.0
        %828 = vmatpush1.msra.mxu0 0.0
        %829 = vmatprep.subr.mxu0 0.0
        %830 = vmatpush1.msra.mxu0 0.0
        %831 = vmatprep.subr.mxu0 0.0
        %832 = vmatpush1.msra.mxu0 0.0
        %833 = vmatprep.subr.mxu0 0.0
        %834 = vmatpush1.msra.mxu0 0.0
        %835 = vmatprep.subr.mxu0 0.0
        %836 = vmatpush1.msra.mxu0 0.0
        %837 = vmatprep.subr.mxu0 0.0
        %838 = vmatpush1.msra.mxu0 0.0
        %839 = vmatprep.subr.mxu0 0.0
        %840 = vmatpush1.msra.mxu0 0.0
        %841 = vmatprep.subr.mxu0 0.0
        %842 = vmatpush1.msra.mxu0 0.0
        %843 = vmatprep.subr.mxu0 0.0
        %844 = vmatpush1.msra.mxu0 0.0
        %845 = vmatprep.subr.mxu0 0.0
        %846 = vmatpush1.msra.mxu0 0.0
        %847 = vmatprep.subr.mxu0 0.0
        %848 = vmatpush1.msra.mxu0 0.0
        %849 = vmatprep.subr.mxu0 0.0
        %850 = vmatpush1.msra.mxu0 0.0
        %851 = vmatprep.subr.mxu0 0.0
        %852 = vmatpush1.msra.mxu0 0.0
        %853 = vmatprep.subr.mxu0 0.0
        %854 = vmatpush1.msra.mxu0 0.0
        %855 = vmatprep.subr.mxu0 0.0
        %856 = vmatpush1.msra.mxu0 0.0
        %857 = vmatprep.subr.mxu0 0.0
        %858 = vmatpush1.msra.mxu0 0.0
        %859 = vmatprep.subr.mxu0 0.0
        %860 = vmatpush1.msra.mxu0 0.0
        %861 = vmatprep.subr.mxu0 0.0
        %862 = vmatpush1.msra.mxu0 0.0
        %863 = vmatprep.subr.mxu0 0.0
        %864 = vmatpush1.msra.mxu0 0.0
        %865 = vmatprep.subr.mxu0 0.0
        %866 = vmatpush1.msra.mxu0 0.0
        %867 = vmatprep.subr.mxu0 0.0
        %868 = vmatpush1.msra.mxu0 0.0
        %869 = vmatprep.subr.mxu0 0.0
        %870 = vmatpush1.msra.mxu0 0.0
        %871 = vmatprep.subr.mxu0 0.0
        %872 = vmatpush1.msra.mxu0 0.0
        %873 = vmatprep.subr.mxu0 0.0
        %874 = vmatpush1.msra.mxu0 0.0
        %875 = vmatprep.subr.mxu0 0.0
        %876 = vmatpush1.msra.mxu0 0.0
        %877 = vmatprep.subr.mxu0 0.0
        %878 = vmatpush1.msra.mxu0 0.0
        %879 = vmatprep.subr.mxu0 0.0
        %880 = vmatpush1.msra.mxu0 0.0
        %881 = vmatprep.subr.mxu0 0.0
        %882 = vmatpush1.msra.mxu0 0.0
        %883 = vmatprep.subr.mxu0 0.0
        %884 = vmatpush1.msra.mxu0 0.0
        %885 = vmatprep.subr.mxu0 0.0
        %886 = vmatpush1.msra.mxu0 0.0
        %887 = vmatprep.subr.mxu0 0.0
        %888 = vmatpush1.msra.mxu0 0.0
        %889 = vmatprep.mubr.f32.mxu0 0.0
        %890 = vmatmul.mubr.f32.gmra.mrb[0].mxu0 %v823
        %v891 = vpop.f32.mrb[0].mxu0
        %v892 = vadd.f32 0.0, %v891
        %v893 = vpop.f32.mrb[0].mxu0
        %894 = vdwg.mxu0
        %895 = vrot.lane.b32.xlu0 %v727, 120
        %v896 = vpop.permute.xlu0 %895
        %897 = vrot.lane.b32.xlu0 %v727, 88
        %v898 = vpop.permute.xlu0 %897
        %v899 = vsel %vm733, %v896, 0
        %v901 = vsel %vm733, %v898, 0
        %903 = vmatprep.subr.mxu0 0.0
        %904 = vmatpush1.xpose.msra.mxu0 %v901
        %905 = vmatprep.subr.mxu0 0.0
        %906 = vmatpush1.xpose.msra.mxu0 0.0
        %907 = vmatprep.subr.mxu0 0.0
        %908 = vmatpush1.xpose.msra.mxu0 0.0
        %909 = vmatprep.subr.mxu0 0.0
        %910 = vmatpush1.xpose.msra.mxu0 0.0
        %911 = vmatprep.subr.mxu0 0.0
        %912 = vmatpush1.xpose.msra.mxu0 0.0
        %913 = vmatprep.subr.mxu0 0.0
        %914 = vmatpush1.xpose.msra.mxu0 0.0
        %915 = vmatprep.subr.mxu0 0.0
        %916 = vmatpush1.xpose.msra.mxu0 0.0
        %917 = vmatprep.subr.mxu0 0.0
        %918 = vmatpush1.xpose.msra.mxu0 0.0
        %919 = vmatprep.subr.mxu0 0.0
        %920 = vmatpush1.xpose.msra.mxu0 0.0
        %921 = vmatprep.subr.mxu0 0.0
        %922 = vmatpush1.xpose.msra.mxu0 0.0
        %923 = vmatprep.subr.mxu0 0.0
        %924 = vmatpush1.xpose.msra.mxu0 0.0
        %925 = vmatprep.subr.mxu0 0.0
        %926 = vmatpush1.xpose.msra.mxu0 0.0
        %927 = vmatprep.subr.mxu0 0.0
        %928 = vmatpush1.xpose.msra.mxu0 0.0
        %929 = vmatprep.subr.mxu0 0.0
        %930 = vmatpush1.xpose.msra.mxu0 0.0
        %931 = vmatprep.subr.mxu0 0.0
        %932 = vmatpush1.xpose.msra.mxu0 0.0
        %933 = vmatprep.subr.mxu0 0.0
        %934 = vmatpush1.xpose.msra.mxu0 0.0
        %935 = vmatprep.subr.mxu0 0.0
        %936 = vmatpush1.xpose.msra.mxu0 0.0
        %937 = vmatprep.subr.mxu0 0.0
        %938 = vmatpush1.xpose.msra.mxu0 0.0
        %939 = vmatprep.subr.mxu0 0.0
        %940 = vmatpush1.xpose.msra.mxu0 0.0
        %941 = vmatprep.subr.mxu0 0.0
        %942 = vmatpush1.xpose.msra.mxu0 0.0
        %943 = vmatprep.subr.mxu0 0.0
        %944 = vmatpush1.xpose.msra.mxu0 0.0
        %945 = vmatprep.subr.mxu0 0.0
        %946 = vmatpush1.xpose.msra.mxu0 0.0
        %947 = vmatprep.subr.mxu0 0.0
        %948 = vmatpush1.xpose.msra.mxu0 0.0
        %949 = vmatprep.subr.mxu0 0.0
        %950 = vmatpush1.xpose.msra.mxu0 0.0
        %951 = vmatprep.subr.mxu0 0.0
        %952 = vmatpush1.xpose.msra.mxu0 0.0
        %953 = vmatprep.subr.mxu0 0.0
        %954 = vmatpush1.xpose.msra.mxu0 0.0
        %955 = vmatprep.subr.mxu0 0.0
        %956 = vmatpush1.xpose.msra.mxu0 0.0
        %957 = vmatprep.subr.mxu0 0.0
        %958 = vmatpush1.xpose.msra.mxu0 0.0
        %959 = vmatprep.subr.mxu0 0.0
        %960 = vmatpush1.xpose.msra.mxu0 0.0
        %961 = vmatprep.subr.mxu0 0.0
        %962 = vmatpush1.xpose.msra.mxu0 0.0
        %963 = vmatprep.subr.mxu0 0.0
        %964 = vmatpush1.xpose.msra.mxu0 0.0
        %965 = vmatprep.subr.mxu0 0.0
        %966 = vmatpush1.xpose.msra.mxu0 0.0
        %967 = vmatprep.mubr.f32.mxu0 0.0
        %968 = vmatmul.mubr.f32.gmra.mrb[0].mxu0 %v899
        %v969 = vpop.f32.mrb[0].mxu0
        %v970 = vadd.f32 %v651, %v969
        %v971 = vpop.f32.mrb[0].mxu0
        %972 = vdwg.mxu0
        %v973 = vsel %vm733, %v970, -inf
        %974 = vmax.xlane.f32.xlu0 %v973
        %v975 = vpop.xlane.xlu0 %974
        %v976 = vsub.f32 %v970, %v975
        %v977 = vmul.f32 %v976, 1.442695
        %v978 = vpow.pop %v977
        %v979 = vsel %vm733, %v978, 0.0
        %980 = vadd.xlane.f32.xlu0 %v979
        %v981 = vpop.xlane.xlu0 %980
        %v982 = vrcp.pop %v981
        %v983 = vmul.f32 %v978, %v982
        %984 = vrot.lane.b32.xlu0 %v727, 56
        %v985 = vpop.permute.xlu0 %984
        %v988 = vsel %vm733, %v983, 0
        %990 = vmatprep.subr.mxu0 0.0
        %991 = vmatpush1.msra.mxu0 %v985
        %992 = vmatprep.subr.mxu0 0.0
        %993 = vmatpush1.msra.mxu0 0.0
        %994 = vmatprep.subr.mxu0 0.0
        %995 = vmatpush1.msra.mxu0 0.0
        %996 = vmatprep.subr.mxu0 0.0
        %997 = vmatpush1.msra.mxu0 0.0
        %998 = vmatprep.subr.mxu0 0.0
        %999 = vmatpush1.msra.mxu0 0.0
        %1000 = vmatprep.subr.mxu0 0.0
        %1001 = vmatpush1.msra.mxu0 0.0
        %1002 = vmatprep.subr.mxu0 0.0
        %1003 = vmatpush1.msra.mxu0 0.0
        %1004 = vmatprep.subr.mxu0 0.0
        %1005 = vmatpush1.msra.mxu0 0.0
        %1006 = vmatprep.subr.mxu0 0.0
        %1007 = vmatpush1.msra.mxu0 0.0
        %1008 = vmatprep.subr.mxu0 0.0
        %1009 = vmatpush1.msra.mxu0 0.0
        %1010 = vmatprep.subr.mxu0 0.0
        %1011 = vmatpush1.msra.mxu0 0.0
        %1012 = vmatprep.subr.mxu0 0.0
        %1013 = vmatpush1.msra.mxu0 0.0
        %1014 = vmatprep.subr.mxu0 0.0
        %1015 = vmatpush1.msra.mxu0 0.0
        %1016 = vmatprep.subr.mxu0 0.0
        %1017 = vmatpush1.msra.mxu0 0.0
        %1018 = vmatprep.subr.mxu0 0.0
        %1019 = vmatpush1.msra.mxu0 0.0
        %1020 = vmatprep.subr.mxu0 0.0
        %1021 = vmatpush1.msra.mxu0 0.0
        %1022 = vmatprep.subr.mxu0 0.0
        %1023 = vmatpush1.msra.mxu0 0.0
        %1024 = vmatprep.subr.mxu0 0.0
        %1025 = vmatpush1.msra.mxu0 0.0
        %1026 = vmatprep.subr.mxu0 0.0
        %1027 = vmatpush1.msra.mxu0 0.0
        %1028 = vmatprep.subr.mxu0 0.0
        %1029 = vmatpush1.msra.mxu0 0.0
        %1030 = vmatprep.subr.mxu0 0.0
        %1031 = vmatpush1.msra.mxu0 0.0
        %1032 = vmatprep.subr.mxu0 0.0
        %1033 = vmatpush1.msra.mxu0 0.0
        %1034 = vmatprep.subr.mxu0 0.0
        %1035 = vmatpush1.msra.mxu0 0.0
        %1036 = vmatprep.subr.mxu0 0.0
        %1037 = vmatpush1.msra.mxu0 0.0
        %1038 = vmatprep.subr.mxu0 0.0
        %1039 = vmatpush1.msra.mxu0 0.0
        %1040 = vmatprep.subr.mxu0 0.0
        %1041 = vmatpush1.msra.mxu0 0.0
        %1042 = vmatprep.subr.mxu0 0.0
        %1043 = vmatpush1.msra.mxu0 0.0
        %1044 = vmatprep.subr.mxu0 0.0
        %1045 = vmatpush1.msra.mxu0 0.0
        %1046 = vmatprep.subr.mxu0 0.0
        %1047 = vmatpush1.msra.mxu0 0.0
        %1048 = vmatprep.subr.mxu0 0.0
        %1049 = vmatpush1.msra.mxu0 0.0
        %1050 = vmatprep.subr.mxu0 0.0
        %1051 = vmatpush1.msra.mxu0 0.0
        %1052 = vmatprep.subr.mxu0 0.0
        %1053 = vmatpush1.msra.mxu0 0.0
        %1054 = vmatprep.mubr.f32.mxu0 0.0
        %1055 = vmatmul.mubr.f32.gmra.mrb[0].mxu0 %v988
        %v1056 = vpop.f32.mrb[0].mxu0
        %v1057 = vadd.f32 0.0, %v1056
        %v1058 = vpop.f32.mrb[0].mxu0
        %1059 = vdwg.mxu0
        %1060 = vrot.lane.b32.xlu0 %v727, 112
        %v1061 = vpop.permute.xlu0 %1060
        %1062 = vrot.lane.b32.xlu0 %v727, 80
        %v1063 = vpop.permute.xlu0 %1062
        %v1064 = vsel %vm733, %v1061, 0
        %v1066 = vsel %vm733, %v1063, 0
        %1068 = vmatprep.subr.mxu0 0.0
        %1069 = vmatpush1.xpose.msra.mxu0 %v1066
        %1070 = vmatprep.subr.mxu0 0.0
        %1071 = vmatpush1.xpose.msra.mxu0 0.0
        %1072 = vmatprep.subr.mxu0 0.0
        %1073 = vmatpush1.xpose.msra.mxu0 0.0
        %1074 = vmatprep.subr.mxu0 0.0
        %1075 = vmatpush1.xpose.msra.mxu0 0.0
        %1076 = vmatprep.subr.mxu0 0.0
        %1077 = vmatpush1.xpose.msra.mxu0 0.0
        %1078 = vmatprep.subr.mxu0 0.0
        %1079 = vmatpush1.xpose.msra.mxu0 0.0
        %1080 = vmatprep.subr.mxu0 0.0
        %1081 = vmatpush1.xpose.msra.mxu0 0.0
        %1082 = vmatprep.subr.mxu0 0.0
        %1083 = vmatpush1.xpose.msra.mxu0 0.0
        %1084 = vmatprep.subr.mxu0 0.0
        %1085 = vmatpush1.xpose.msra.mxu0 0.0
        %1086 = vmatprep.subr.mxu0 0.0
        %1087 = vmatpush1.xpose.msra.mxu0 0.0
        %1088 = vmatprep.subr.mxu0 0.0
        %1089 = vmatpush1.xpose.msra.mxu0 0.0
        %1090 = vmatprep.subr.mxu0 0.0
        %1091 = vmatpush1.xpose.msra.mxu0 0.0
        %1092 = vmatprep.subr.mxu0 0.0
        %1093 = vmatpush1.xpose.msra.mxu0 0.0
        %1094 = vmatprep.subr.mxu0 0.0
        %1095 = vmatpush1.xpose.msra.mxu0 0.0
        %1096 = vmatprep.subr.mxu0 0.0
        %1097 = vmatpush1.xpose.msra.mxu0 0.0
        %1098 = vmatprep.subr.mxu0 0.0
        %1099 = vmatpush1.xpose.msra.mxu0 0.0
        %1100 = vmatprep.subr.mxu0 0.0
        %1101 = vmatpush1.xpose.msra.mxu0 0.0
        %1102 = vmatprep.subr.mxu0 0.0
        %1103 = vmatpush1.xpose.msra.mxu0 0.0
        %1104 = vmatprep.subr.mxu0 0.0
        %1105 = vmatpush1.xpose.msra.mxu0 0.0
        %1106 = vmatprep.subr.mxu0 0.0
        %1107 = vmatpush1.xpose.msra.mxu0 0.0
        %1108 = vmatprep.subr.mxu0 0.0
        %1109 = vmatpush1.xpose.msra.mxu0 0.0
        %1110 = vmatprep.subr.mxu0 0.0
        %1111 = vmatpush1.xpose.msra.mxu0 0.0
        %1112 = vmatprep.subr.mxu0 0.0
        %1113 = vmatpush1.xpose.msra.mxu0 0.0
        %1114 = vmatprep.subr.mxu0 0.0
        %1115 = vmatpush1.xpose.msra.mxu0 0.0
        %1116 = vmatprep.subr.mxu0 0.0
        %1117 = vmatpush1.xpose.msra.mxu0 0.0
        %1118 = vmatprep.subr.mxu0 0.0
        %1119 = vmatpush1.xpose.msra.mxu0 0.0
        %1120 = vmatprep.subr.mxu0 0.0
        %1121 = vmatpush1.xpose.msra.mxu0 0.0
        %1122 = vmatprep.subr.mxu0 0.0
        %1123 = vmatpush1.xpose.msra.mxu0 0.0
        %1124 = vmatprep.subr.mxu0 0.0
        %1125 = vmatpush1.xpose.msra.mxu0 0.0
        %1126 = vmatprep.subr.mxu0 0.0
        %1127 = vmatpush1.xpose.msra.mxu0 0.0
        %1128 = vmatprep.subr.mxu0 0.0
        %1129 = vmatpush1.xpose.msra.mxu0 0.0
        %1130 = vmatprep.subr.mxu0 0.0
        %1131 = vmatpush1.xpose.msra.mxu0 0.0
        %1132 = vmatprep.mubr.f32.mxu0 0.0
        %1133 = vmatmul.mubr.f32.gmra.mrb[0].mxu0 %v1064
        %v1134 = vpop.f32.mrb[0].mxu0
        %v1135 = vadd.f32 %v651, %v1134
        %v1136 = vpop.f32.mrb[0].mxu0
        %1137 = vdwg.mxu0
        %v1138 = vsel %vm733, %v1135, -inf
        %1139 = vmax.xlane.f32.xlu0 %v1138
        %v1140 = vpop.xlane.xlu0 %1139
        %v1141 = vsub.f32 %v1135, %v1140
        %v1142 = vmul.f32 %v1141, 1.442695
        %v1143 = vpow.pop %v1142
        %v1144 = vsel %vm733, %v1143, 0.0
        %1145 = vadd.xlane.f32.xlu0 %v1144
        %v1146 = vpop.xlane.xlu0 %1145
        %v1147 = vrcp.pop %v1146
        %v1148 = vmul.f32 %v1143, %v1147
        %1149 = vrot.lane.b32.xlu0 %v727, 48
        %v1150 = vpop.permute.xlu0 %1149
        %v1153 = vsel %vm733, %v1148, 0
        %1155 = vmatprep.subr.mxu0 0.0
        %1156 = vmatpush1.msra.mxu0 %v1150
        %1157 = vmatprep.subr.mxu0 0.0
        %1158 = vmatpush1.msra.mxu0 0.0
        %1159 = vmatprep.subr.mxu0 0.0
        %1160 = vmatpush1.msra.mxu0 0.0
        %1161 = vmatprep.subr.mxu0 0.0
        %1162 = vmatpush1.msra.mxu0 0.0
        %1163 = vmatprep.subr.mxu0 0.0
        %1164 = vmatpush1.msra.mxu0 0.0
        %1165 = vmatprep.subr.mxu0 0.0
        %1166 = vmatpush1.msra.mxu0 0.0
        %1167 = vmatprep.subr.mxu0 0.0
        %1168 = vmatpush1.msra.mxu0 0.0
        %1169 = vmatprep.subr.mxu0 0.0
        %1170 = vmatpush1.msra.mxu0 0.0
        %1171 = vmatprep.subr.mxu0 0.0
        %1172 = vmatpush1.msra.mxu0 0.0
        %1173 = vmatprep.subr.mxu0 0.0
        %1174 = vmatpush1.msra.mxu0 0.0
        %1175 = vmatprep.subr.mxu0 0.0
        %1176 = vmatpush1.msra.mxu0 0.0
        %1177 = vmatprep.subr.mxu0 0.0
        %1178 = vmatpush1.msra.mxu0 0.0
        %1179 = vmatprep.subr.mxu0 0.0
        %1180 = vmatpush1.msra.mxu0 0.0
        %1181 = vmatprep.subr.mxu0 0.0
        %1182 = vmatpush1.msra.mxu0 0.0
        %1183 = vmatprep.subr.mxu0 0.0
        %1184 = vmatpush1.msra.mxu0 0.0
        %1185 = vmatprep.subr.mxu0 0.0
        %1186 = vmatpush1.msra.mxu0 0.0
        %1187 = vmatprep.subr.mxu0 0.0
        %1188 = vmatpush1.msra.mxu0 0.0
        %1189 = vmatprep.subr.mxu0 0.0
        %1190 = vmatpush1.msra.mxu0 0.0
        %1191 = vmatprep.subr.mxu0 0.0
        %1192 = vmatpush1.msra.mxu0 0.0
        %1193 = vmatprep.subr.mxu0 0.0
        %1194 = vmatpush1.msra.mxu0 0.0
        %1195 = vmatprep.subr.mxu0 0.0
        %1196 = vmatpush1.msra.mxu0 0.0
        %1197 = vmatprep.subr.mxu0 0.0
        %1198 = vmatpush1.msra.mxu0 0.0
        %1199 = vmatprep.subr.mxu0 0.0
        %1200 = vmatpush1.msra.mxu0 0.0
        %1201 = vmatprep.subr.mxu0 0.0
        %1202 = vmatpush1.msra.mxu0 0.0
        %1203 = vmatprep.subr.mxu0 0.0
        %1204 = vmatpush1.msra.mxu0 0.0
        %1205 = vmatprep.subr.mxu0 0.0
        %1206 = vmatpush1.msra.mxu0 0.0
        %1207 = vmatprep.subr.mxu0 0.0
        %1208 = vmatpush1.msra.mxu0 0.0
        %1209 = vmatprep.subr.mxu0 0.0
        %1210 = vmatpush1.msra.mxu0 0.0
        %1211 = vmatprep.subr.mxu0 0.0
        %1212 = vmatpush1.msra.mxu0 0.0
        %1213 = vmatprep.subr.mxu0 0.0
        %1214 = vmatpush1.msra.mxu0 0.0
        %1215 = vmatprep.subr.mxu0 0.0
        %1216 = vmatpush1.msra.mxu0 0.0
        %1217 = vmatprep.subr.mxu0 0.0
        %1218 = vmatpush1.msra.mxu0 0.0
        %1219 = vmatprep.mubr.f32.mxu0 0.0
        %1220 = vmatmul.mubr.f32.gmra.mrb[0].mxu0 %v1153
        %v1221 = vpop.f32.mrb[0].mxu0
        %v1222 = vadd.f32 0.0, %v1221
        %v1223 = vpop.f32.mrb[0].mxu0
        %1224 = vdwg.mxu0
        %1225 = vrot.lane.b32.xlu0 %v727, 104
        %v1226 = vpop.permute.xlu0 %1225
        %1227 = vrot.lane.b32.xlu0 %v727, 72
        %v1228 = vpop.permute.xlu0 %1227
        %v1229 = vsel %vm733, %v1226, 0
        %v1231 = vsel %vm733, %v1228, 0
        %1233 = vmatprep.subr.mxu0 0.0
        %1234 = vmatpush1.xpose.msra.mxu0 %v1231
        %1235 = vmatprep.subr.mxu0 0.0
        %1236 = vmatpush1.xpose.msra.mxu0 0.0
        %1237 = vmatprep.subr.mxu0 0.0
        %1238 = vmatpush1.xpose.msra.mxu0 0.0
        %1239 = vmatprep.subr.mxu0 0.0
        %1240 = vmatpush1.xpose.msra.mxu0 0.0
        %1241 = vmatprep.subr.mxu0 0.0
        %1242 = vmatpush1.xpose.msra.mxu0 0.0
        %1243 = vmatprep.subr.mxu0 0.0
        %1244 = vmatpush1.xpose.msra.mxu0 0.0
        %1245 = vmatprep.subr.mxu0 0.0
        %1246 = vmatpush1.xpose.msra.mxu0 0.0
        %1247 = vmatprep.subr.mxu0 0.0
        %1248 = vmatpush1.xpose.msra.mxu0 0.0
        %1249 = vmatprep.subr.mxu0 0.0
        %1250 = vmatpush1.xpose.msra.mxu0 0.0
        %1251 = vmatprep.subr.mxu0 0.0
        %1252 = vmatpush1.xpose.msra.mxu0 0.0
        %1253 = vmatprep.subr.mxu0 0.0
        %1254 = vmatpush1.xpose.msra.mxu0 0.0
        %1255 = vmatprep.subr.mxu0 0.0
        %1256 = vmatpush1.xpose.msra.mxu0 0.0
        %1257 = vmatprep.subr.mxu0 0.0
        %1258 = vmatpush1.xpose.msra.mxu0 0.0
        %1259 = vmatprep.subr.mxu0 0.0
        %1260 = vmatpush1.xpose.msra.mxu0 0.0
        %1261 = vmatprep.subr.mxu0 0.0
        %1262 = vmatpush1.xpose.msra.mxu0 0.0
        %1263 = vmatprep.subr.mxu0 0.0
        %1264 = vmatpush1.xpose.msra.mxu0 0.0
        %1265 = vmatprep.subr.mxu0 0.0
        %1266 = vmatpush1.xpose.msra.mxu0 0.0
        %1267 = vmatprep.subr.mxu0 0.0
        %1268 = vmatpush1.xpose.msra.mxu0 0.0
        %1269 = vmatprep.subr.mxu0 0.0
        %1270 = vmatpush1.xpose.msra.mxu0 0.0
        %1271 = vmatprep.subr.mxu0 0.0
        %1272 = vmatpush1.xpose.msra.mxu0 0.0
        %1273 = vmatprep.subr.mxu0 0.0
        %1274 = vmatpush1.xpose.msra.mxu0 0.0
        %1275 = vmatprep.subr.mxu0 0.0
        %1276 = vmatpush1.xpose.msra.mxu0 0.0
        %1277 = vmatprep.subr.mxu0 0.0
        %1278 = vmatpush1.xpose.msra.mxu0 0.0
        %1279 = vmatprep.subr.mxu0 0.0
        %1280 = vmatpush1.xpose.msra.mxu0 0.0
        %1281 = vmatprep.subr.mxu0 0.0
        %1282 = vmatpush1.xpose.msra.mxu0 0.0
        %1283 = vmatprep.subr.mxu0 0.0
        %1284 = vmatpush1.xpose.msra.mxu0 0.0
        %1285 = vmatprep.subr.mxu0 0.0
        %1286 = vmatpush1.xpose.msra.mxu0 0.0
        %1287 = vmatprep.subr.mxu0 0.0
        %1288 = vmatpush1.xpose.msra.mxu0 0.0
        %1289 = vmatprep.subr.mxu0 0.0
        %1290 = vmatpush1.xpose.msra.mxu0 0.0
        %1291 = vmatprep.subr.mxu0 0.0
        %1292 = vmatpush1.xpose.msra.mxu0 0.0
        %1293 = vmatprep.subr.mxu0 0.0
        %1294 = vmatpush1.xpose.msra.mxu0 0.0
        %1295 = vmatprep.subr.mxu0 0.0
        %1296 = vmatpush1.xpose.msra.mxu0 0.0
        %1297 = vmatprep.mubr.f32.mxu0 0.0
        %1298 = vmatmul.mubr.f32.gmra.mrb[0].mxu0 %v1229
        %v1299 = vpop.f32.mrb[0].mxu0
        %v1300 = vadd.f32 %v651, %v1299
        %v1301 = vpop.f32.mrb[0].mxu0
        %1302 = vdwg.mxu0
        %v1303 = vsel %vm733, %v1300, -inf
        %1304 = vmax.xlane.f32.xlu0 %v1303
        %v1305 = vpop.xlane.xlu0 %1304
        %v1306 = vsub.f32 %v1300, %v1305
        %v1307 = vmul.f32 %v1306, 1.442695
        %v1308 = vpow.pop %v1307
        %v1309 = vsel %vm733, %v1308, 0.0
        %1310 = vadd.xlane.f32.xlu0 %v1309
        %v1311 = vpop.xlane.xlu0 %1310
        %v1312 = vrcp.pop %v1311
        %v1313 = vmul.f32 %v1308, %v1312
        %1314 = vrot.lane.b32.xlu0 %v727, 40
        %v1315 = vpop.permute.xlu0 %1314
        %v1318 = vsel %vm733, %v1313, 0
        %1320 = vmatprep.subr.mxu0 0.0
        %1321 = vmatpush1.msra.mxu0 %v1315
        %1322 = vmatprep.subr.mxu0 0.0
        %1323 = vmatpush1.msra.mxu0 0.0
        %1324 = vmatprep.subr.mxu0 0.0
        %1325 = vmatpush1.msra.mxu0 0.0
        %1326 = vmatprep.subr.mxu0 0.0
        %1327 = vmatpush1.msra.mxu0 0.0
        %1328 = vmatprep.subr.mxu0 0.0
        %1329 = vmatpush1.msra.mxu0 0.0
        %1330 = vmatprep.subr.mxu0 0.0
        %1331 = vmatpush1.msra.mxu0 0.0
        %1332 = vmatprep.subr.mxu0 0.0
        %1333 = vmatpush1.msra.mxu0 0.0
        %1334 = vmatprep.subr.mxu0 0.0
        %1335 = vmatpush1.msra.mxu0 0.0
        %1336 = vmatprep.subr.mxu0 0.0
        %1337 = vmatpush1.msra.mxu0 0.0
        %1338 = vmatprep.subr.mxu0 0.0
        %1339 = vmatpush1.msra.mxu0 0.0
        %1340 = vmatprep.subr.mxu0 0.0
        %1341 = vmatpush1.msra.mxu0 0.0
        %1342 = vmatprep.subr.mxu0 0.0
        %1343 = vmatpush1.msra.mxu0 0.0
        %1344 = vmatprep.subr.mxu0 0.0
        %1345 = vmatpush1.msra.mxu0 0.0
        %1346 = vmatprep.subr.mxu0 0.0
        %1347 = vmatpush1.msra.mxu0 0.0
        %1348 = vmatprep.subr.mxu0 0.0
        %1349 = vmatpush1.msra.mxu0 0.0
        %1350 = vmatprep.subr.mxu0 0.0
        %1351 = vmatpush1.msra.mxu0 0.0
        %1352 = vmatprep.subr.mxu0 0.0
        %1353 = vmatpush1.msra.mxu0 0.0
        %1354 = vmatprep.subr.mxu0 0.0
        %1355 = vmatpush1.msra.mxu0 0.0
        %1356 = vmatprep.subr.mxu0 0.0
        %1357 = vmatpush1.msra.mxu0 0.0
        %1358 = vmatprep.subr.mxu0 0.0
        %1359 = vmatpush1.msra.mxu0 0.0
        %1360 = vmatprep.subr.mxu0 0.0
        %1361 = vmatpush1.msra.mxu0 0.0
        %1362 = vmatprep.subr.mxu0 0.0
        %1363 = vmatpush1.msra.mxu0 0.0
        %1364 = vmatprep.subr.mxu0 0.0
        %1365 = vmatpush1.msra.mxu0 0.0
        %1366 = vmatprep.subr.mxu0 0.0
        %1367 = vmatpush1.msra.mxu0 0.0
        %1368 = vmatprep.subr.mxu0 0.0
        %1369 = vmatpush1.msra.mxu0 0.0
        %1370 = vmatprep.subr.mxu0 0.0
        %1371 = vmatpush1.msra.mxu0 0.0
        %1372 = vmatprep.subr.mxu0 0.0
        %1373 = vmatpush1.msra.mxu0 0.0
        %1374 = vmatprep.subr.mxu0 0.0
        %1375 = vmatpush1.msra.mxu0 0.0
        %1376 = vmatprep.subr.mxu0 0.0
        %1377 = vmatpush1.msra.mxu0 0.0
        %1378 = vmatprep.subr.mxu0 0.0
        %1379 = vmatpush1.msra.mxu0 0.0
        %1380 = vmatprep.subr.mxu0 0.0
        %1381 = vmatpush1.msra.mxu0 0.0
        %1382 = vmatprep.subr.mxu0 0.0
        %1383 = vmatpush1.msra.mxu0 0.0
        %1384 = vmatprep.mubr.f32.mxu0 0.0
        %1385 = vmatmul.mubr.f32.gmra.mrb[0].mxu0 %v1318
        %v1386 = vpop.f32.mrb[0].mxu0
        %v1387 = vadd.f32 0.0, %v1386
        %v1388 = vpop.f32.mrb[0].mxu0
        %1389 = vdwg.mxu0
        %1391 = vrot.lane.b32.xlu0 %v1057, 8
        %v1392 = vpop.permute.xlu0 %1391
        %1395 = vrot.lane.b32.xlu0 %v1222, 16
        %v1396 = vpop.permute.xlu0 %1395
        %1399 = vrot.lane.b32.xlu0 %v1387, 24
        %v1400 = vpop.permute.xlu0 %1399
        %v1402 = vsel %vm733, %v892, %v1392
        %vm1403 = vcmask 130048
        %v1404 = vsel %vm1403, %v1402, %v1396
        %vm1405 = vcmask 195584
        %v1406 = vsel %vm1405, %v1404, %v1400
        %v1407 = vld [vmem:[%s611] sm:$0xff]
        %v1408 = vld [vmem:[%s611 + $0x8] sm:$0xff]
        %v1409 = vld [vmem:[%s611 + $0x10] sm:$0xff]
        %v1410 = vld [vmem:[%s611 + $0x18] sm:$0xff]
        %v1411 = vld [vmem:[%s614] sm:$0x1]
        %v1413 = vlaneseq
        %v1414 = vshrl.u32 %v1413, 7
        %v1415 = vsub.s32 0, %v1414
        %v1416 = vrot.slane %v1411, %v1415
        %v1419 = vsel %vm656, %v1406, 0
        %1421 = vmatprep.subr.mxu0 0.0
        %1422 = vmatpush1.msra.mxu0 %v1407
        %1423 = vmatprep.subr.mxu0 0.0
        %1424 = vmatpush1.msra.mxu0 %v1408
        %1425 = vmatprep.subr.mxu0 0.0
        %1426 = vmatpush1.msra.mxu0 %v1409
        %1427 = vmatprep.subr.mxu0 0.0
        %1428 = vmatpush1.msra.mxu0 %v1410
        %1429 = vmatprep.subr.mxu0 0.0
        %1430 = vmatpush1.msra.mxu0 0.0
        %1431 = vmatprep.subr.mxu0 0.0
        %1432 = vmatpush1.msra.mxu0 0.0
        %1433 = vmatprep.subr.mxu0 0.0
        %1434 = vmatpush1.msra.mxu0 0.0
        %1435 = vmatprep.subr.mxu0 0.0
        %1436 = vmatpush1.msra.mxu0 0.0
        %1437 = vmatprep.subr.mxu0 0.0
        %1438 = vmatpush1.msra.mxu0 0.0
        %1439 = vmatprep.subr.mxu0 0.0
        %1440 = vmatpush1.msra.mxu0 0.0
        %1441 = vmatprep.subr.mxu0 0.0
        %1442 = vmatpush1.msra.mxu0 0.0
        %1443 = vmatprep.subr.mxu0 0.0
        %1444 = vmatpush1.msra.mxu0 0.0
        %1445 = vmatprep.subr.mxu0 0.0
        %1446 = vmatpush1.msra.mxu0 0.0
        %1447 = vmatprep.subr.mxu0 0.0
        %1448 = vmatpush1.msra.mxu0 0.0
        %1449 = vmatprep.subr.mxu0 0.0
        %1450 = vmatpush1.msra.mxu0 0.0
        %1451 = vmatprep.subr.mxu0 0.0
        %1452 = vmatpush1.msra.mxu0 0.0
        %1453 = vmatprep.subr.mxu0 0.0
        %1454 = vmatpush1.msra.mxu0 0.0
        %1455 = vmatprep.subr.mxu0 0.0
        %1456 = vmatpush1.msra.mxu0 0.0
        %1457 = vmatprep.subr.mxu0 0.0
        %1458 = vmatpush1.msra.mxu0 0.0
        %1459 = vmatprep.subr.mxu0 0.0
        %1460 = vmatpush1.msra.mxu0 0.0
        %1461 = vmatprep.subr.mxu0 0.0
        %1462 = vmatpush1.msra.mxu0 0.0
        %1463 = vmatprep.subr.mxu0 0.0
        %1464 = vmatpush1.msra.mxu0 0.0
        %1465 = vmatprep.subr.mxu0 0.0
        %1466 = vmatpush1.msra.mxu0 0.0
        %1467 = vmatprep.subr.mxu0 0.0
        %1468 = vmatpush1.msra.mxu0 0.0
        %1469 = vmatprep.subr.mxu0 0.0
        %1470 = vmatpush1.msra.mxu0 0.0
        %1471 = vmatprep.subr.mxu0 0.0
        %1472 = vmatpush1.msra.mxu0 0.0
        %1473 = vmatprep.subr.mxu0 0.0
        %1474 = vmatpush1.msra.mxu0 0.0
        %1475 = vmatprep.subr.mxu0 0.0
        %1476 = vmatpush1.msra.mxu0 0.0
        %1477 = vmatprep.subr.mxu0 0.0
        %1478 = vmatpush1.msra.mxu0 0.0
        %1479 = vmatprep.subr.mxu0 0.0
        %1480 = vmatpush1.msra.mxu0 0.0
        %1481 = vmatprep.subr.mxu0 0.0
        %1482 = vmatpush1.msra.mxu0 0.0
        %1483 = vmatprep.subr.mxu0 0.0
        %1484 = vmatpush1.msra.mxu0 0.0
        %1485 = vmatprep.mubr.f32.mxu0 0.0
        %1486 = vmatmul.mubr.f32.gmra.mrb[0].mxu0 %v1419
        %v1487 = vpop.f32.mrb[0].mxu0
        %v1488 = vadd.f32 %v1416, %v1487
        %v1489 = vpop.f32.mrb[0].mxu0
        %1490 = vdwg.mxu0
        %v1491 = vadd.f32 %v1488, %v650
        %v1492 = vsel %vm656, %v1491, 0.0
        %1493 = vadd.xlane.f32.xlu0 %v1492
        %v1494 = vpop.xlane.xlu0 %1493
        %v1495 = vrcp.pop 32.0
        %v1496 = vmul.f32 %v1494, %v1495
        %v1497 = vsub.f32 %v1491, %v1496
        %v1498 = vmul.f32 %v1497, %v1497
        %v1499 = vsel %vm656, %v1498, 0.0
        %1500 = vadd.xlane.f32.xlu0 %v1499
        %v1501 = vpop.xlane.xlu0 %1500
        %v1502 = vmul.f32 %v1501, %v1495
        %v1503 = vadd.f32 %v1502, 1e-05
        %v1504 = vrsqrt.pop %v1503
        %v1505 = vmul.f32 %v1497, %v1504
        %v1506 = vld [vmem:[%s617] sm:$0x1]
        %v1508 = vlaneseq
        %v1509 = vshrl.u32 %v1508, 7
        %v1510 = vsub.s32 0, %v1509
        %v1511 = vrot.slane %v1506, %v1510
        %v1513 = vmul.f32 %v1505, %v1511
        %v1514 = vld [vmem:[%s620] sm:$0x1]
        %v1516 = vlaneseq
        %v1517 = vshrl.u32 %v1516, 7
        %v1518 = vsub.s32 0, %v1517
        %v1519 = vrot.slane %v1514, %v1518
        %v1521 = vadd.f32 %v1513, %v1519
        %v1522 = vld [vmem:[%s625] sm:$0xff]
        %v1523 = vld [vmem:[%s625 + $0x8] sm:$0xff]
        %v1524 = vld [vmem:[%s625 + $0x10] sm:$0xff]
        %v1525 = vld [vmem:[%s625 + $0x18] sm:$0xff]
        %v1526 = vld [vmem:[%s628] sm:$0x1]
        %v1528 = vlaneseq
        %v1529 = vshrl.u32 %v1528, 7
        %v1530 = vsub.s32 0, %v1529
        %v1531 = vrot.slane %v1526, %v1530
        %v1534 = vsel %vm656, %v1521, 0
        %1536 = vmatprep.subr.mxu0 0.0
        %1537 = vmatpush1.msra.mxu0 %v1522
        %1538 = vmatprep.subr.mxu0 0.0
        %1539 = vmatpush1.msra.mxu0 %v1523
        %1540 = vmatprep.subr.mxu0 0.0
        %1541 = vmatpush1.msra.mxu0 %v1524
        %1542 = vmatprep.subr.mxu0 0.0
        %1543 = vmatpush1.msra.mxu0 %v1525
        %1544 = vmatprep.subr.mxu0 0.0
        %1545 = vmatpush1.msra.mxu0 0.0
        %1546 = vmatprep.subr.mxu0 0.0
        %1547 = vmatpush1.msra.mxu0 0.0
        %1548 = vmatprep.subr.mxu0 0.0
        %1549 = vmatpush1.msra.mxu0 0.0
        %1550 = vmatprep.subr.mxu0 0.0
        %1551 = vmatpush1.msra.mxu0 0.0
        %1552 = vmatprep.subr.mxu0 0.0
        %1553 = vmatpush1.msra.mxu0 0.0
        %1554 = vmatprep.subr.mxu0 0.0
        %1555 = vmatpush1.msra.mxu0 0.0
        %1556 = vmatprep.subr.mxu0 0.0
        %1557 = vmatpush1.msra.mxu0 0.0
        %1558 = vmatprep.subr.mxu0 0.0
        %1559 = vmatpush1.msra.mxu0 0.0
        %1560 = vmatprep.subr.mxu0 0.0
        %1561 = vmatpush1.msra.mxu0 0.0
        %1562 = vmatprep.subr.mxu0 0.0
        %1563 = vmatpush1.msra.mxu0 0.0
        %1564 = vmatprep.subr.mxu0 0.0
        %1565 = vmatpush1.msra.mxu0 0.0
        %1566 = vmatprep.subr.mxu0 0.0
        %1567 = vmatpush1.msra.mxu0 0.0
        %1568 = vmatprep.subr.mxu0 0.0
        %1569 = vmatpush1.msra.mxu0 0.0
        %1570 = vmatprep.subr.mxu0 0.0
        %1571 = vmatpush1.msra.mxu0 0.0
        %1572 = vmatprep.subr.mxu0 0.0
        %1573 = vmatpush1.msra.mxu0 0.0
        %1574 = vmatprep.subr.mxu0 0.0
        %1575 = vmatpush1.msra.mxu0 0.0
        %1576 = vmatprep.subr.mxu0 0.0
        %1577 = vmatpush1.msra.mxu0 0.0
        %1578 = vmatprep.subr.mxu0 0.0
        %1579 = vmatpush1.msra.mxu0 0.0
        %1580 = vmatprep.subr.mxu0 0.0
        %1581 = vmatpush1.msra.mxu0 0.0
        %1582 = vmatprep.subr.mxu0 0.0
        %1583 = vmatpush1.msra.mxu0 0.0
        %1584 = vmatprep.subr.mxu0 0.0
        %1585 = vmatpush1.msra.mxu0 0.0
        %1586 = vmatprep.subr.mxu0 0.0
        %1587 = vmatpush1.msra.mxu0 0.0
        %1588 = vmatprep.subr.mxu0 0.0
        %1589 = vmatpush1.msra.mxu0 0.0
        %1590 = vmatprep.subr.mxu0 0.0
        %1591 = vmatpush1.msra.mxu0 0.0
        %1592 = vmatprep.subr.mxu0 0.0
        %1593 = vmatpush1.msra.mxu0 0.0
        %1594 = vmatprep.subr.mxu0 0.0
        %1595 = vmatpush1.msra.mxu0 0.0
        %1596 = vmatprep.subr.mxu0 0.0
        %1597 = vmatpush1.msra.mxu0 0.0
        %1598 = vmatprep.subr.mxu0 0.0
        %1599 = vmatpush1.msra.mxu0 0.0
        %1600 = vmatprep.mubr.f32.mxu0 0.0
        %1601 = vmatmul.mubr.f32.gmra.mrb[0].mxu0 %v1534
        %v1602 = vpop.f32.mrb[0].mxu0
        %v1603 = vadd.f32 %v1531, %v1602
        %v1604 = vpop.f32.mrb[0].mxu0
        %1605 = vdwg.mxu0
        %v1606 = vmax.f32 %v1603, 0.0
        %v1607 = vld [vmem:[%s633] sm:$0xff]
        %v1608 = vld [vmem:[%s633 + $0x8] sm:$0xff]
        %v1609 = vld [vmem:[%s633 + $0x10] sm:$0xff]
        %v1610 = vld [vmem:[%s633 + $0x18] sm:$0xff]
        %v1611 = vld [vmem:[%s633 + $0x20] sm:$0xff]
        %v1612 = vld [vmem:[%s633 + $0x28] sm:$0xff]
        %v1613 = vld [vmem:[%s633 + $0x30] sm:$0xff]
        %v1614 = vld [vmem:[%s633 + $0x38] sm:$0xff]
        %v1615 = vld [vmem:[%s633 + $0x40] sm:$0xff]
        %v1616 = vld [vmem:[%s633 + $0x48] sm:$0xff]
        %v1617 = vld [vmem:[%s633 + $0x50] sm:$0xff]
        %v1618 = vld [vmem:[%s633 + $0x58] sm:$0xff]
        %v1619 = vld [vmem:[%s633 + $0x60] sm:$0xff]
        %v1620 = vld [vmem:[%s633 + $0x68] sm:$0xff]
        %v1621 = vld [vmem:[%s633 + $0x70] sm:$0xff]
        %v1622 = vld [vmem:[%s633 + $0x78] sm:$0xff]
        %v1623 = vld [vmem:[%s636] sm:$0x1]
        %v1625 = vlaneseq
        %v1626 = vshrl.u32 %v1625, 7
        %v1627 = vsub.s32 0, %v1626
        %v1628 = vrot.slane %v1623, %v1627
        %1630 = vmatprep.subr.mxu0 0.0
        %1631 = vmatpush1.msra.mxu0 %v1607
        %1632 = vmatprep.subr.mxu0 0.0
        %1633 = vmatpush1.msra.mxu0 %v1608
        %1634 = vmatprep.subr.mxu0 0.0
        %1635 = vmatpush1.msra.mxu0 %v1609
        %1636 = vmatprep.subr.mxu0 0.0
        %1637 = vmatpush1.msra.mxu0 %v1610
        %1638 = vmatprep.subr.mxu0 0.0
        %1639 = vmatpush1.msra.mxu0 %v1611
        %1640 = vmatprep.subr.mxu0 0.0
        %1641 = vmatpush1.msra.mxu0 %v1612
        %1642 = vmatprep.subr.mxu0 0.0
        %1643 = vmatpush1.msra.mxu0 %v1613
        %1644 = vmatprep.subr.mxu0 0.0
        %1645 = vmatpush1.msra.mxu0 %v1614
        %1646 = vmatprep.subr.mxu0 0.0
        %1647 = vmatpush1.msra.mxu0 %v1615
        %1648 = vmatprep.subr.mxu0 0.0
        %1649 = vmatpush1.msra.mxu0 %v1616
        %1650 = vmatprep.subr.mxu0 0.0
        %1651 = vmatpush1.msra.mxu0 %v1617
        %1652 = vmatprep.subr.mxu0 0.0
        %1653 = vmatpush1.msra.mxu0 %v1618
        %1654 = vmatprep.subr.mxu0 0.0
        %1655 = vmatpush1.msra.mxu0 %v1619
        %1656 = vmatprep.subr.mxu0 0.0
        %1657 = vmatpush1.msra.mxu0 %v1620
        %1658 = vmatprep.subr.mxu0 0.0
        %1659 = vmatpush1.msra.mxu0 %v1621
        %1660 = vmatprep.subr.mxu0 0.0
        %1661 = vmatpush1.msra.mxu0 %v1622
        %1662 = vmatprep.subr.mxu0 0.0
        %1663 = vmatpush1.msra.mxu0 0.0
        %1664 = vmatprep.subr.mxu0 0.0
        %1665 = vmatpush1.msra.mxu0 0.0
        %1666 = vmatprep.subr.mxu0 0.0
        %1667 = vmatpush1.msra.mxu0 0.0
        %1668 = vmatprep.subr.mxu0 0.0
        %1669 = vmatpush1.msra.mxu0 0.0
        %1670 = vmatprep.subr.mxu0 0.0
        %1671 = vmatpush1.msra.mxu0 0.0
        %1672 = vmatprep.subr.mxu0 0.0
        %1673 = vmatpush1.msra.mxu0 0.0
        %1674 = vmatprep.subr.mxu0 0.0
        %1675 = vmatpush1.msra.mxu0 0.0
        %1676 = vmatprep.subr.mxu0 0.0
        %1677 = vmatpush1.msra.mxu0 0.0
        %1678 = vmatprep.subr.mxu0 0.0
        %1679 = vmatpush1.msra.mxu0 0.0
        %1680 = vmatprep.subr.mxu0 0.0
        %1681 = vmatpush1.msra.mxu0 0.0
        %1682 = vmatprep.subr.mxu0 0.0
        %1683 = vmatpush1.msra.mxu0 0.0
        %1684 = vmatprep.subr.mxu0 0.0
        %1685 = vmatpush1.msra.mxu0 0.0
        %1686 = vmatprep.subr.mxu0 0.0
        %1687 = vmatpush1.msra.mxu0 0.0
        %1688 = vmatprep.subr.mxu0 0.0
        %1689 = vmatpush1.msra.mxu0 0.0
        %1690 = vmatprep.subr.mxu0 0.0
        %1691 = vmatpush1.msra.mxu0 0.0
        %1692 = vmatprep.subr.mxu0 0.0
        %1693 = vmatpush1.msra.mxu0 0.0
        %1694 = vmatprep.mubr.f32.mxu0 0.0
        %1695 = vmatmul.mubr.f32.gmra.mrb[0].mxu0 %v1606
        %v1696 = vpop.f32.mrb[0].mxu0
        %v1697 = vadd.f32 %v1628, %v1696
        %v1698 = vpop.f32.mrb[0].mxu0
        %1699 = vdwg.mxu0
        %v1700 = vadd.f32 %v1697, %v1521
        %v1701 = vsel %vm656, %v1700, 0.0
        %1702 = vadd.xlane.f32.xlu0 %v1701
        %v1703 = vpop.xlane.xlu0 %1702
        %v1704 = vmul.f32 %v1703, %v1495
        %v1705 = vsub.f32 %v1700, %v1704
        %v1706 = vmul.f32 %v1705, %v1705
        %v1707 = vsel %vm656, %v1706, 0.0
        %1708 = vadd.xlane.f32.xlu0 %v1707
        %v1709 = vpop.xlane.xlu0 %1708
        %v1710 = vmul.f32 %v1709, %v1495
        %v1711 = vadd.f32 %v1710, 1e-05
        %v1712 = vrsqrt.pop %v1711
        %v1713 = vmul.f32 %v1705, %v1712
        %v1714 = vld [vmem:[%s639] sm:$0x1]
        %v1716 = vlaneseq
        %v1717 = vshrl.u32 %v1716, 7
        %v1718 = vsub.s32 0, %v1717
        %v1719 = vrot.slane %v1714, %v1718
        %v1721 = vmul.f32 %v1713, %v1719
        %v1722 = vld [vmem:[%s642] sm:$0x1]
        %v1724 = vlaneseq
        %v1725 = vshrl.u32 %v1724, 7
        %v1726 = vsub.s32 0, %v1725
        %v1727 = vrot.slane %v1722, %v1726
        %v1729 = vadd.f32 %v1721, %v1727
        %1730 = vst.msk [vmem:[#allocation2] sm:$0xff] %vm656, %v1729
        %p1731 = scmp.eq.s32.totalorder %s32, 1
        // Predicated region
        $region77: #{tpu_custom_call.1} parent=71 // pred_check
          %p1732 = pneg %p1731
        $region78: #{tpu_custom_call.1} parent=71 // pred_check_branch
          %1734 = sbr.rel (%p1732) target = $region80
        $region79: #{tpu_custom_call.1} parent=71 // pred_region
          %1735 = vst.msk [vmem:[%s593] sm:$0xff] %vm656, %v1729
        $region80: #{tpu_custom_call.1} parent=71 // pred_fallthru
          _
        %s1736 = sand.u32 %s385, 1
        %s1737 = scalar_lea.sflag [#allocation4], %s1736
        %s1738 = sand.u32 %s385, 1
        %s1739 = smul.addr %s1738, 8
        %s1740 = scalar_lea.vmem [#allocation3], %s1739
        // Predicated region
        $region81: #{tpu_custom_call.1} parent=71 // pred_check
          %p1741 = pneg %p395
        $region82: #{tpu_custom_call.1} parent=71 // pred_check_branch
          %1743 = sbr.rel (%p1741) target = $region84
        $region83: #{tpu_custom_call.1} parent=71 // pred_region
          %s1745 = ssub.s32 128, 128
          %1746 = vsyncadd %s1737, %s1745
          %s1747 = smul.addr %s31, 128
          %s1748 = scalar_lea.hbm %s13, %s1747
          %s1750 = sshll.u32 %s1740, 4
          %s1751 = int_to_ptr.vmem [resolvable:$true] %s1750
          %1753 = dma.vmem_to_hbm [thread:$0]  %s1751, 128, %s1748, %s1737
        $region84: #{tpu_custom_call.1} parent=71 // pred_fallthru
          _
      $region72: #{tpu_custom_call.1} parent=5 // pred_fallthru
        _
      %p1754 = scmp.le.s32.totalorder 2, %s22
      // Predicated region
      $region85: #{tpu_custom_call.1} parent=5 // pred_check
        %p1755 = pneg %p1754
      $region86: #{tpu_custom_call.1} parent=5 // pred_check_branch
        %1757 = sbr.rel (%p1755) target = $region88
      $region87: #{tpu_custom_call.1} parent=5 // pred_region
        %s1758 = ssub.s32 %s22, 2
        // Predicated region
        $region89: #{tpu_custom_call.1} parent=87 // pred_check
          %p1759 = pneg %p401
        $region90: #{tpu_custom_call.1} parent=87 // pred_check_branch
          %1761 = sbr.rel (%p1759) target = $region92
        $region91: #{tpu_custom_call.1} parent=87 // pred_region
          %s1762 = sand.u32 %s386, 1
          %s1763 = scalar_lea.sflag [#allocation4], %s1762
          %s1764 = sand.u32 %s386, 1
          %s1765 = smul.addr %s1764, 8
          %s1766 = scalar_lea.vmem [#allocation3], %s1765
          %1767 = dma.done %s1763, 128
        $region92: #{tpu_custom_call.1} parent=87 // pred_fallthru
          _
      $region88: #{tpu_custom_call.1} parent=5 // pred_fallthru
        _
    $region6: #{tpu_custom_call.1} parent=1 // loop_footer
      %s26 = sadd.s32 1, %s22
    $region7: #{tpu_custom_call.1} parent=1 // loop_footer_branch
      %21 = sbr.rel target = $region3
    $region8: #{tpu_custom_call.1} parent=1 // loop_exit
      _
    %1768 = vsyncpa [#allocation4], 1
    %s1769 = scalar_lea.sflag [#allocation4], 1
    %1770 = vsyncpa %s1769, 1

</llo_original>
